<compile_context>
chip_gen: v6e
topology: v6e:2x2x1
jax: 0.10.0
libtpu: 0.0.40
codegen_flags: <defaults>
</compile_context>

<pallas_src>
import jax
import jax.numpy as jnp
from jax.experimental import pallas as pl
from jax.experimental.pallas import tpu as pltpu

# ---------------- config (small BERT-like encoder) ----------------
VOCAB = 64
B, S = 2, 8          # batch, sequence length
D = 32               # hidden size
H, DH = 4, 8         # heads, head dim (H * DH == D)
FF = 64              # intermediate (FFN) size
LAYERS = 2
LN_EPS = 1e-12


# ---------------- the per-(batch, layer) Pallas kernel ----------------
def _encoder_kernel(x_ref, mask_ref, emb_g_ref, emb_b_ref,
                    wqkv_ref, bqkv_ref, wo_ref, bo_ref,
                    ln1g_ref, ln1b_ref, w1_ref, b1_ref,
                    w2_ref, b2_ref, ln2g_ref, ln2b_ref,
                    o_ref, x_acc):
    """grid = (batch, layer). x_acc (VMEM f32) carries the residual stream across layers."""
    l = pl.program_id(1)

    def layer_norm(x, g, b):                 # f32 VPU math; rsqrt goes to the EUP
        mu = jnp.mean(x, axis=-1, keepdims=True)
        var = jnp.mean(jnp.square(x - mu), axis=-1, keepdims=True)
        return (x - mu) * jax.lax.rsqrt(var + LN_EPS) * g + b

    def mxu(a, b):                           # bf16 MXU inputs, f32 accumulation
        return jnp.dot(a.astype(jnp.bfloat16), b.astype(jnp.bfloat16),
                       preferred_element_type=jnp.float32)

    # layer 0: embedding LayerNorm seeds the resident residual stream.
    @pl.when(l == 0)
    def _():
        x_acc[...] = layer_norm(x_ref[0].astype(jnp.float32),
                                emb_g_ref[...], emb_b_ref[...])

    x = x_acc[...]                           # (S, D) f32 residual stream
    add_mask = mask_ref[0]                   # (1, S) additive key-padding mask

    # ---- self-attention: one fused (D, 3D) QKV matmul, head-batched ----
    qkv = mxu(x, wqkv_ref[0]) + bqkv_ref[0]                       # (S, 3D) f32
    # heads to a leading batch axis: (S, 3D) -> (S, 3H, DH) -> (3H, S, DH)
    qkv_h = pltpu.einshape("sgd->gsd", qkv.reshape(S, 3 * H, DH))
    q = qkv_h[0 * H:1 * H].astype(jnp.bfloat16)                   # (H, S, DH)
    k = qkv_h[1 * H:2 * H].astype(jnp.bfloat16)
    v = qkv_h[2 * H:3 * H].astype(jnp.bfloat16)

    # 1/sqrt(DH) is pre-folded into the Q columns of wqkv/bqkv (see init_params).
    s = jnp.einsum('hqd,hkd->hqk', q, k,
                   preferred_element_type=jnp.float32) + add_mask  # (H, S, S)
    s = s - jnp.max(s, axis=-1, keepdims=True)
    p = jnp.exp(s)
    # approx reciprocal -> EUP slot; rows sum to 1 within ~1e-3 (set approx=False
    # if bit-level parity with the reference softmax is required).
    p = p * pl.reciprocal(jnp.sum(p, axis=-1, keepdims=True), approx=True)
    ctx = jnp.einsum('hqk,hkd->hqd', p.astype(jnp.bfloat16), v,
                     preferred_element_type=jnp.float32)           # (H, S, DH)
    # output projection consumed head-batched (wo stored as (H, DH, D)), then
    # summed over heads -> no head-merge relayout / concatenate.
    proj_h = jnp.einsum('hsd,hde->hse', ctx.astype(jnp.bfloat16), wo_ref[0],
                        preferred_element_type=jnp.float32)        # (H, S, D)
    attn = jnp.sum(proj_h, axis=0) + bo_ref[0]                     # (S, D)
    x = layer_norm(attn + x, ln1g_ref[0], ln1b_ref[0])

    # ---- FFN ----
    inter = mxu(x, w1_ref[0]) + b1_ref[0]
    # tanh-approx GELU (EUP-native; <1e-3 from HF's exact-erf GELU)
    inter = jax.nn.gelu(inter, approximate=True)
    ffn = mxu(inter, w2_ref[0]) + b2_ref[0]
    x = layer_norm(ffn + x, ln2g_ref[0], ln2b_ref[0])

    x_acc[...] = x

    @pl.when(l == pl.num_programs(1) - 1)
    def _():
        o_ref[0] = x.astype(o_ref.dtype)     # bf16 writeback (halves HBM store traffic)


# ---------------- parameter init (deterministic, synthetic) ----------------
def init_params(key):
    keys = iter(jax.random.split(key, 32))

    def nrm(shape):
        return 0.02 * jax.random.normal(next(keys), shape, jnp.float32)

    def stack(shape):
        return jnp.stack([nrm(shape) for _ in range(LAYERS)])

    scale = 1.0 / float(DH) ** 0.5
    wqkv = stack((D, 3 * D))
    bqkv = jnp.zeros((LAYERS, 1, 3 * D), jnp.float32)
    # fold the 1/sqrt(head_dim) attention scale into the Q projection (weights AND
    # bias) so the kernel never multiplies the (S, S) score matrix by it.
    wqkv = wqkv.at[:, :, :D].multiply(scale)
    bqkv = bqkv.at[:, :, :D].multiply(scale)

    return {
        "word_emb": nrm((VOCAB, D)),
        "pos_emb": nrm((S, D)),
        "type_emb": nrm((2, D)),
        "emb_ln_g": jnp.ones((1, D), jnp.float32),
        "emb_ln_b": jnp.zeros((1, D), jnp.float32),
        # per-layer weights stacked on a leading layer axis (streamed per grid step)
        "wqkv": wqkv.astype(jnp.bfloat16),                         # (L, D, 3D)
        "bqkv": bqkv,                                              # (L, 1, 3D)
        "wo": stack((D, D)).reshape(LAYERS, H, DH, D).astype(jnp.bfloat16),  # head-major
        "bo": jnp.zeros((LAYERS, 1, D), jnp.float32),
        "ln1_g": jnp.ones((LAYERS, 1, D), jnp.float32),
        "ln1_b": jnp.zeros((LAYERS, 1, D), jnp.float32),
        "w1": stack((D, FF)).astype(jnp.bfloat16),
        "b1": jnp.zeros((LAYERS, 1, FF), jnp.float32),
        "w2": stack((FF, D)).astype(jnp.bfloat16),
        "b2": jnp.zeros((LAYERS, 1, D), jnp.float32),
        "ln2_g": jnp.ones((LAYERS, 1, D), jnp.float32),
        "ln2_b": jnp.zeros((LAYERS, 1, D), jnp.float32),
    }


# ---------------- forward pass: gather glue in JAX, encoder fused ----------------
@jax.jit
def bert_embed(params, token_ids, attention_mask):
    bsz, ssz = token_ids.shape

    # embeddings (data-dependent gathers stay in XLA); bf16 halves the kernel input DMA,
    # LayerNorm math is upcast to f32 inside the kernel.
    x_emb = (params["word_emb"][token_ids]
             + params["pos_emb"][None, :, :]
             + params["type_emb"][0][None, None, :]).astype(jnp.bfloat16)    # (B, S, D)

    # per-batch additive key-padding mask (B, 1, S) -- no dense (B*S, B*S) mask tensor.
    # NOTE: a fully padded sequence (all-zero mask row) degenerates, exactly as in the
    # reference model; guard upstream if empty sequences are possible.
    add_mask = jnp.where(attention_mask[:, None, :] > 0, 0.0, -1e9).astype(jnp.float32)

    def layer_spec(arr):   # stacked per-layer weights: stream block l ('arbitrary' axis)
        return pl.BlockSpec((1,) + arr.shape[1:],
                            lambda b, l, nd=arr.ndim: (l,) + (0,) * (nd - 1))

    def batch_spec(arr):   # per-batch activations: block b, resident across layers
        return pl.BlockSpec((1,) + arr.shape[1:],
                            lambda b, l, nd=arr.ndim: (b,) + (0,) * (nd - 1))

    def shared_spec(arr):  # tiny shared params (embedding LayerNorm)
        return pl.BlockSpec(arr.shape, lambda b, l, nd=arr.ndim: (0,) * nd)

    # advisory cost estimate so XLA overlaps the gathers / mask build with the kernel
    flops = LAYERS * bsz * (2 * ssz * D * (3 * D)            # fused QKV
                            + 2 * H * ssz * ssz * DH * 2     # scores + P@V
                            + 2 * ssz * D * D                # output projection
                            + 2 * ssz * D * FF * 2)          # FFN
    transcendentals = LAYERS * bsz * (H * ssz * ssz + ssz * FF + 4 * ssz)
    weight_bytes = sum(int(v.size) * v.dtype.itemsize for n, v in params.items()
                       if n not in ("word_emb", "pos_emb", "type_emb"))
    bytes_accessed = (int(x_emb.size) * 2 + int(add_mask.size) * 4
                      + weight_bytes + bsz * ssz * D * 2)

    hidden = pl.pallas_call(
        _encoder_kernel,
        out_shape=jax.ShapeDtypeStruct((bsz, ssz, D), jnp.bfloat16),
        grid_spec=pltpu.PrefetchScalarGridSpec(
            num_scalar_prefetch=0,
            grid=(bsz, LAYERS),
            in_specs=[
                batch_spec(x_emb), batch_spec(add_mask),
                shared_spec(params["emb_ln_g"]), shared_spec(params["emb_ln_b"]),
                layer_spec(params["wqkv"]), layer_spec(params["bqkv"]),
                layer_spec(params["wo"]), layer_spec(params["bo"]),
                layer_spec(params["ln1_g"]), layer_spec(params["ln1_b"]),
                layer_spec(params["w1"]), layer_spec(params["b1"]),
                layer_spec(params["w2"]), layer_spec(params["b2"]),
                layer_spec(params["ln2_g"]), layer_spec(params["ln2_b"]),
            ],
            out_specs=pl.BlockSpec((1, ssz, D), lambda b, l: (b, 0, 0)),
            scratch_shapes=[pltpu.VMEM((ssz, D), jnp.float32)],   # resident residual stream
        ),
        compiler_params=pltpu.CompilerParams(
            dimension_semantics=("parallel", "arbitrary")),       # batch || layers seq.
        cost_estimate=pl.CostEstimate(flops=flops,
                                      transcendentals=transcendentals,
                                      bytes_accessed=bytes_accessed),
    )(x_emb, add_mask,
      params["emb_ln_g"], params["emb_ln_b"],
      params["wqkv"], params["bqkv"], params["wo"], params["bo"],
      params["ln1_g"], params["ln1_b"], params["w1"], params["b1"],
      params["w2"], params["b2"], params["ln2_g"], params["ln2_b"])

    # BertEmbedder returns last_hidden_state: (B, S, D)
    # (at real bert-base dims D=768 the store is naturally lane-dense; at the toy
    #  D=32 a flatten-to-lanes relayout would cost as much as the masked store it avoids)
    return hidden


if __name__ == "__main__":
    root = jax.random.PRNGKey(0)
    k_params, k_ids = jax.random.split(root)

    params = init_params(k_params)
    token_ids = jax.random.randint(k_ids, (B, S), 0, VOCAB, dtype=jnp.int32)
    # two sentences of different lengths (padding mask like the HF tokenizer would emit)
    attention_mask = jnp.array(
        [[1, 1, 1, 1, 1, 1, 1, 1],
         [1, 1, 1, 1, 1, 0, 0, 0]], dtype=jnp.int32)

    hidden = bert_embed(params, token_ids, attention_mask)
    hidden = jax.block_until_ready(hidden)

    assert hidden.shape == (B, S, D)
    assert bool(jnp.all(jnp.isfinite(hidden.astype(jnp.float32))))
    print("KERNEL_OK")
</pallas_src>

<mosaic_0001>
module attributes {stable_mosaic.version = 11 : i64} {
  func.func @_encoder_kernel(%arg0: i32, %arg1: i32, %arg2: memref<1x8x32xbf16, #tpu.memory_space<vmem>>, %arg3: memref<1x1x8xf32, #tpu.memory_space<vmem>>, %arg4: memref<1x32xf32, #tpu.memory_space<vmem>>, %arg5: memref<1x32xf32, #tpu.memory_space<vmem>>, %arg6: memref<1x32x96xbf16, #tpu.memory_space<vmem>>, %arg7: memref<1x1x96xf32, #tpu.memory_space<vmem>>, %arg8: memref<1x4x8x32xbf16, #tpu.memory_space<vmem>>, %arg9: memref<1x1x32xf32, #tpu.memory_space<vmem>>, %arg10: memref<1x1x32xf32, #tpu.memory_space<vmem>>, %arg11: memref<1x1x32xf32, #tpu.memory_space<vmem>>, %arg12: memref<1x32x64xbf16, #tpu.memory_space<vmem>>, %arg13: memref<1x1x64xf32, #tpu.memory_space<vmem>>, %arg14: memref<1x64x32xbf16, #tpu.memory_space<vmem>>, %arg15: memref<1x1x32xf32, #tpu.memory_space<vmem>>, %arg16: memref<1x1x32xf32, #tpu.memory_space<vmem>>, %arg17: memref<1x1x32xf32, #tpu.memory_space<vmem>>, %arg18: memref<1x8x32xbf16, #tpu.memory_space<vmem>>, %arg19: memref<8x32xf32, #tpu.memory_space<vmem>>) attributes {dimension_semantics = [#tpu.dimension_semantics<parallel>, #tpu.dimension_semantics<arbitrary>], iteration_bounds = array<i64: 2, 2>, scalar_prefetch = 0 : i64, scratch_operands = 1 : i64, tpu.core_type = #tpu.core_type<tc>, window_params = [{transform_indices = @transform_0, window_bounds = array<i64: 1, 8, 32>}, {transform_indices = @transform_1, window_bounds = array<i64: 1, 1, 8>}, {pipeline_mode = #tpu.pipeline_mode<synchronous>, transform_indices = @transform_2, window_bounds = array<i64: 1, 32>}, {pipeline_mode = #tpu.pipeline_mode<synchronous>, transform_indices = @transform_3, window_bounds = array<i64: 1, 32>}, {transform_indices = @transform_4, window_bounds = array<i64: 1, 32, 96>}, {transform_indices = @transform_5, window_bounds = array<i64: 1, 1, 96>}, {transform_indices = @transform_6, window_bounds = array<i64: 1, 4, 8, 32>}, {transform_indices = @transform_7, window_bounds = array<i64: 1, 1, 32>}, {transform_indices = @transform_8, window_bounds = array<i64: 1, 1, 32>}, {transform_indices = @transform_9, window_bounds = array<i64: 1, 1, 32>}, {transform_indices = @transform_10, window_bounds = array<i64: 1, 32, 64>}, {transform_indices = @transform_11, window_bounds = array<i64: 1, 1, 64>}, {transform_indices = @transform_12, window_bounds = array<i64: 1, 64, 32>}, {transform_indices = @transform_13, window_bounds = array<i64: 1, 1, 32>}, {transform_indices = @transform_14, window_bounds = array<i64: 1, 1, 32>}, {transform_indices = @transform_15, window_bounds = array<i64: 1, 1, 32>}, {transform_indices = @transform_16, window_bounds = array<i64: 1, 8, 32>}]} {
    %c0_i32 = arith.constant 0 : i32
    %0 = arith.cmpi eq, %arg1, %c0_i32 : i32
    %1 = arith.extui %0 : i1 to i32
    %c0_i32_0 = arith.constant 0 : i32
    %2 = arith.cmpi ne, %1, %c0_i32_0 : i32
    scf.if %2 {
      %c0_67 = arith.constant 0 : index
      %c0_68 = arith.constant 0 : index
      %c0_69 = arith.constant 0 : index
      %134 = vector.load %arg2[%c0_67, %c0_68, %c0_69] : memref<1x8x32xbf16, #tpu.memory_space<vmem>>, vector<1x8x32xbf16>
      %135 = vector.shape_cast %134 : vector<1x8x32xbf16> to vector<8x32xbf16>
      %136 = arith.extf %135 : vector<8x32xbf16> to vector<8x32xf32>
      %c0_70 = arith.constant 0 : index
      %c0_71 = arith.constant 0 : index
      %137 = vector.load %arg4[%c0_70, %c0_71] : memref<1x32xf32, #tpu.memory_space<vmem>>, vector<1x32xf32>
      %c0_72 = arith.constant 0 : index
      %c0_73 = arith.constant 0 : index
      %138 = vector.load %arg5[%c0_72, %c0_73] : memref<1x32xf32, #tpu.memory_space<vmem>>, vector<1x32xf32>
      %cst_74 = arith.constant dense<0.000000e+00> : vector<8xf32>
      %139 = vector.multi_reduction <add>, %136, %cst_74 [1] : vector<8x32xf32> to vector<8xf32>
      %140 = vector.shape_cast %139 : vector<8xf32> to vector<8x1xf32>
      %cst_75 = arith.constant 3.200000e+01 : f32
      %141 = vector.broadcast %cst_75 : f32 to vector<8x1xf32>
      %142 = arith.divf %140, %141 : vector<8x1xf32>
      %143 = vector.broadcast %142 : vector<8x1xf32> to vector<8x32xf32>
      %144 = arith.subf %136, %143 : vector<8x32xf32>
      %145 = arith.mulf %144, %144 : vector<8x32xf32>
      %cst_76 = arith.constant dense<0.000000e+00> : vector<8xf32>
      %146 = vector.multi_reduction <add>, %145, %cst_76 [1] : vector<8x32xf32> to vector<8xf32>
      %147 = vector.shape_cast %146 : vector<8xf32> to vector<8x1xf32>
      %cst_77 = arith.constant 3.200000e+01 : f32
      %148 = vector.broadcast %cst_77 : f32 to vector<8x1xf32>
      %149 = arith.divf %147, %148 : vector<8x1xf32>
      %150 = vector.broadcast %142 : vector<8x1xf32> to vector<8x32xf32>
      %151 = arith.subf %136, %150 : vector<8x32xf32>
      %cst_78 = arith.constant 9.99999996E-13 : f32
      %152 = vector.broadcast %cst_78 : f32 to vector<8x1xf32>
      %153 = arith.addf %149, %152 : vector<8x1xf32>
      %154 = math.rsqrt %153 : vector<8x1xf32>
      %155 = vector.broadcast %154 : vector<8x1xf32> to vector<8x32xf32>
      %156 = arith.mulf %151, %155 : vector<8x32xf32>
      %157 = vector.broadcast %137 : vector<1x32xf32> to vector<8x32xf32>
      %158 = arith.mulf %156, %157 : vector<8x32xf32>
      %159 = vector.broadcast %138 : vector<1x32xf32> to vector<8x32xf32>
      %160 = arith.addf %158, %159 : vector<8x32xf32>
      %c0_79 = arith.constant 0 : index
      %c0_80 = arith.constant 0 : index
      %161 = vector.load %arg19[%c0_79, %c0_80] : memref<8x32xf32, #tpu.memory_space<vmem>>, vector<8x32xf32>
      tpu.vector_store %arg19[%c0_79, %c0_80], %160 {strides = array<i32>} : memref<8x32xf32, #tpu.memory_space<vmem>>, vector<8x32xf32>,
    } else {
    }
    %c0 = arith.constant 0 : index
    %c0_1 = arith.constant 0 : index
    %3 = vector.load %arg19[%c0, %c0_1] : memref<8x32xf32, #tpu.memory_space<vmem>>, vector<8x32xf32>
    %c0_2 = arith.constant 0 : index
    %c0_3 = arith.constant 0 : index
    %c0_4 = arith.constant 0 : index
    %4 = vector.load %arg3[%c0_2, %c0_3, %c0_4] : memref<1x1x8xf32, #tpu.memory_space<vmem>>, vector<1x1x8xf32>
    %5 = vector.shape_cast %4 : vector<1x1x8xf32> to vector<1x8xf32>
    %c0_5 = arith.constant 0 : index
    %c0_6 = arith.constant 0 : index
    %c0_7 = arith.constant 0 : index
    %6 = vector.load %arg6[%c0_5, %c0_6, %c0_7] : memref<1x32x96xbf16, #tpu.memory_space<vmem>>, vector<1x32x96xbf16>
    %7 = vector.shape_cast %6 : vector<1x32x96xbf16> to vector<32x96xbf16>
    %8 = arith.truncf %3 : vector<8x32xf32> to vector<8x32xbf16>
    %cst = arith.constant dense<0.000000e+00> : vector<8x96xf32>
    %9 = tpu.matmul %8, %7, %cst {dimension_numbers = #tpu.dot_dimension_numbers<[1], [0], [0], [1], [0, 0, 1, 1], [], []>} : vector<8x32xbf16>, vector<32x96xbf16>, vector<8x96xf32> -> vector<8x96xf32>
    %c0_8 = arith.constant 0 : index
    %c0_9 = arith.constant 0 : index
    %c0_10 = arith.constant 0 : index
    %10 = vector.load %arg7[%c0_8, %c0_9, %c0_10] : memref<1x1x96xf32, #tpu.memory_space<vmem>>, vector<1x1x96xf32>
    %11 = vector.shape_cast %10 : vector<1x1x96xf32> to vector<1x96xf32>
    %12 = vector.broadcast %11 : vector<1x96xf32> to vector<8x96xf32>
    %13 = arith.addf %9, %12 : vector<8x96xf32>
    %14 = vector.shape_cast %13 : vector<8x96xf32> to vector<8x12x8xf32>
    %15 = tpu.transpose %14, [1, 0, 2] : vector<8x12x8xf32> -> vector<12x8x8xf32>
    %16 = vector.extract_strided_slice %15 {offsets = [0, 0, 0], sizes = [4, 8, 8], strides = [1, 1, 1]} : vector<12x8x8xf32> to vector<4x8x8xf32>
    %17 = arith.truncf %16 : vector<4x8x8xf32> to vector<4x8x8xbf16>
    %18 = vector.extract_strided_slice %15 {offsets = [4, 0, 0], sizes = [4, 8, 8], strides = [1, 1, 1]} : vector<12x8x8xf32> to vector<4x8x8xf32>
    %19 = arith.truncf %18 : vector<4x8x8xf32> to vector<4x8x8xbf16>
    %20 = vector.extract_strided_slice %15 {offsets = [8, 0, 0], sizes = [4, 8, 8], strides = [1, 1, 1]} : vector<12x8x8xf32> to vector<4x8x8xf32>
    %21 = arith.truncf %20 : vector<4x8x8xf32> to vector<4x8x8xbf16>
    "tpu.trace_start"() <{level = 10 : i32, message = "hqd,hkd->hqk"}> : () -> ()
    %cst_11 = arith.constant dense<0.000000e+00> : vector<4x8x8xf32>
    %22 = tpu.matmul %17, %19, %cst_11 {dimension_numbers = #tpu.dot_dimension_numbers<[2], [2], [1], [1], [0, 0, 0, 1, 1, 1], [0], [0]>} : vector<4x8x8xbf16>, vector<4x8x8xbf16>, vector<4x8x8xf32> -> vector<4x8x8xf32>
    "tpu.trace_stop"() : () -> ()
    %23 = vector.shape_cast %5 : vector<1x8xf32> to vector<1x1x8xf32>
    %24 = vector.broadcast %23 : vector<1x1x8xf32> to vector<4x8x8xf32>
    %25 = arith.addf %22, %24 : vector<4x8x8xf32>
    %cst_12 = arith.constant dense<0xFF800000> : vector<4x8xf32>
    %26 = vector.multi_reduction <maximumf>, %25, %cst_12 [2] : vector<4x8x8xf32> to vector<4x8xf32>
    %27 = vector.shape_cast %26 : vector<4x8xf32> to vector<4x8x1xf32>
    %28 = vector.broadcast %27 : vector<4x8x1xf32> to vector<4x8x8xf32>
    %29 = arith.subf %25, %28 : vector<4x8x8xf32>
    %30 = math.exp %29 : vector<4x8x8xf32>
    %cst_13 = arith.constant dense<0.000000e+00> : vector<4x8xf32>
    %31 = vector.multi_reduction <add>, %30, %cst_13 [2] : vector<4x8x8xf32> to vector<4x8xf32>
    %32 = vector.shape_cast %31 : vector<4x8xf32> to vector<4x8x1xf32>
    %33 = tpu.reciprocal %32 {approx = true} : vector<4x8x1xf32> -> vector<4x8x1xf32>
    %34 = vector.broadcast %33 : vector<4x8x1xf32> to vector<4x8x8xf32>
    %35 = arith.mulf %30, %34 : vector<4x8x8xf32>
    %36 = arith.truncf %35 : vector<4x8x8xf32> to vector<4x8x8xbf16>
    "tpu.trace_start"() <{level = 10 : i32, message = "hqk,hkd->hqd"}> : () -> ()
    %cst_14 = arith.constant dense<0.000000e+00> : vector<4x8x8xf32>
    %37 = tpu.matmul %36, %21, %cst_14 {dimension_numbers = #tpu.dot_dimension_numbers<[2], [1], [1], [2], [0, 0, 0, 1, 1, 2], [0], [0]>} : vector<4x8x8xbf16>, vector<4x8x8xbf16>, vector<4x8x8xf32> -> vector<4x8x8xf32>
    "tpu.trace_stop"() : () -> ()
    %38 = arith.truncf %37 : vector<4x8x8xf32> to vector<4x8x8xbf16>
    %c0_15 = arith.constant 0 : index
    %c0_16 = arith.constant 0 : index
    %c0_17 = arith.constant 0 : index
    %c0_18 = arith.constant 0 : index
    %39 = vector.load %arg8[%c0_15, %c0_16, %c0_17, %c0_18] : memref<1x4x8x32xbf16, #tpu.memory_space<vmem>>, vector<1x4x8x32xbf16>
    %40 = vector.shape_cast %39 : vector<1x4x8x32xbf16> to vector<4x8x32xbf16>
    "tpu.trace_start"() <{level = 10 : i32, message = "hsd,hde->hse"}> : () -> ()
    %cst_19 = arith.constant dense<0.000000e+00> : vector<4x8x32xf32>
    %41 = tpu.matmul %38, %40, %cst_19 {dimension_numbers = #tpu.dot_dimension_numbers<[2], [1], [1], [2], [0, 0, 0, 1, 1, 2], [0], [0]>} : vector<4x8x8xbf16>, vector<4x8x32xbf16>, vector<4x8x32xf32> -> vector<4x8x32xf32>
    "tpu.trace_stop"() : () -> ()
    %cst_20 = arith.constant dense<0.000000e+00> : vector<8x32xf32>
    %42 = vector.multi_reduction <add>, %41, %cst_20 [0] : vector<4x8x32xf32> to vector<8x32xf32>
    %c0_21 = arith.constant 0 : index
    %c0_22 = arith.constant 0 : index
    %c0_23 = arith.constant 0 : index
    %43 = vector.load %arg9[%c0_21, %c0_22, %c0_23] : memref<1x1x32xf32, #tpu.memory_space<vmem>>, vector<1x1x32xf32>
    %44 = vector.shape_cast %43 : vector<1x1x32xf32> to vector<1x32xf32>
    %45 = vector.broadcast %44 : vector<1x32xf32> to vector<8x32xf32>
    %46 = arith.addf %42, %45 : vector<8x32xf32>
    %47 = arith.addf %46, %3 : vector<8x32xf32>
    %c0_24 = arith.constant 0 : index
    %c0_25 = arith.constant 0 : index
    %c0_26 = arith.constant 0 : index
    %48 = vector.load %arg10[%c0_24, %c0_25, %c0_26] : memref<1x1x32xf32, #tpu.memory_space<vmem>>, vector<1x1x32xf32>
    %49 = vector.shape_cast %48 : vector<1x1x32xf32> to vector<1x32xf32>
    %c0_27 = arith.constant 0 : index
    %c0_28 = arith.constant 0 : index
    %c0_29 = arith.constant 0 : index
    %50 = vector.load %arg11[%c0_27, %c0_28, %c0_29] : memref<1x1x32xf32, #tpu.memory_space<vmem>>, vector<1x1x32xf32>
    %51 = vector.shape_cast %50 : vector<1x1x32xf32> to vector<1x32xf32>
    %cst_30 = arith.constant dense<0.000000e+00> : vector<8xf32>
    %52 = vector.multi_reduction <add>, %47, %cst_30 [1] : vector<8x32xf32> to vector<8xf32>
    %53 = vector.shape_cast %52 : vector<8xf32> to vector<8x1xf32>
    %cst_31 = arith.constant 3.200000e+01 : f32
    %54 = vector.broadcast %cst_31 : f32 to vector<8x1xf32>
    %55 = arith.divf %53, %54 : vector<8x1xf32>
    %56 = vector.broadcast %55 : vector<8x1xf32> to vector<8x32xf32>
    %57 = arith.subf %47, %56 : vector<8x32xf32>
    %58 = arith.mulf %57, %57 : vector<8x32xf32>
    %cst_32 = arith.constant dense<0.000000e+00> : vector<8xf32>
    %59 = vector.multi_reduction <add>, %58, %cst_32 [1] : vector<8x32xf32> to vector<8xf32>
    %60 = vector.shape_cast %59 : vector<8xf32> to vector<8x1xf32>
    %cst_33 = arith.constant 3.200000e+01 : f32
    %61 = vector.broadcast %cst_33 : f32 to vector<8x1xf32>
    %62 = arith.divf %60, %61 : vector<8x1xf32>
    %63 = vector.broadcast %55 : vector<8x1xf32> to vector<8x32xf32>
    %64 = arith.subf %47, %63 : vector<8x32xf32>
    %cst_34 = arith.constant 9.99999996E-13 : f32
    %65 = vector.broadcast %cst_34 : f32 to vector<8x1xf32>
    %66 = arith.addf %62, %65 : vector<8x1xf32>
    %67 = math.rsqrt %66 : vector<8x1xf32>
    %68 = vector.broadcast %67 : vector<8x1xf32> to vector<8x32xf32>
    %69 = arith.mulf %64, %68 : vector<8x32xf32>
    %70 = vector.broadcast %49 : vector<1x32xf32> to vector<8x32xf32>
    %71 = arith.mulf %69, %70 : vector<8x32xf32>
    %72 = vector.broadcast %51 : vector<1x32xf32> to vector<8x32xf32>
    %73 = arith.addf %71, %72 : vector<8x32xf32>
    %c0_35 = arith.constant 0 : index
    %c0_36 = arith.constant 0 : index
    %c0_37 = arith.constant 0 : index
    %74 = vector.load %arg12[%c0_35, %c0_36, %c0_37] : memref<1x32x64xbf16, #tpu.memory_space<vmem>>, vector<1x32x64xbf16>
    %75 = vector.shape_cast %74 : vector<1x32x64xbf16> to vector<32x64xbf16>
    %76 = arith.truncf %73 : vector<8x32xf32> to vector<8x32xbf16>
    %cst_38 = arith.constant dense<0.000000e+00> : vector<8x64xf32>
    %77 = tpu.matmul %76, %75, %cst_38 {dimension_numbers = #tpu.dot_dimension_numbers<[1], [0], [0], [1], [0, 0, 1, 1], [], []>} : vector<8x32xbf16>, vector<32x64xbf16>, vector<8x64xf32> -> vector<8x64xf32>
    %c0_39 = arith.constant 0 : index
    %c0_40 = arith.constant 0 : index
    %c0_41 = arith.constant 0 : index
    %78 = vector.load %arg13[%c0_39, %c0_40, %c0_41] : memref<1x1x64xf32, #tpu.memory_space<vmem>>, vector<1x1x64xf32>
    %79 = vector.shape_cast %78 : vector<1x1x64xf32> to vector<1x64xf32>
    %80 = vector.broadcast %79 : vector<1x64xf32> to vector<8x64xf32>
    %81 = arith.addf %77, %80 : vector<8x64xf32>
    %82 = arith.mulf %81, %81 : vector<8x64xf32>
    %83 = arith.mulf %81, %82 : vector<8x64xf32>
    %cst_42 = arith.constant 4.471500e-02 : f32
    %84 = vector.broadcast %cst_42 : f32 to vector<8x64xf32>
    %85 = arith.mulf %84, %83 : vector<8x64xf32>
    %86 = arith.addf %81, %85 : vector<8x64xf32>
    %cst_43 = arith.constant 0.797884583 : f32
    %87 = vector.broadcast %cst_43 : f32 to vector<8x64xf32>
    %88 = arith.mulf %87, %86 : vector<8x64xf32>
    %89 = math.tanh %88 : vector<8x64xf32>
    %cst_44 = arith.constant 1.000000e+00 : f32
    %90 = vector.broadcast %cst_44 : f32 to vector<8x64xf32>
    %91 = arith.addf %90, %89 : vector<8x64xf32>
    %cst_45 = arith.constant 5.000000e-01 : f32
    %92 = vector.broadcast %cst_45 : f32 to vector<8x64xf32>
    %93 = arith.mulf %92, %91 : vector<8x64xf32>
    %94 = arith.mulf %81, %93 : vector<8x64xf32>
    %c0_46 = arith.constant 0 : index
    %c0_47 = arith.constant 0 : index
    %c0_48 = arith.constant 0 : index
    %95 = vector.load %arg14[%c0_46, %c0_47, %c0_48] : memref<1x64x32xbf16, #tpu.memory_space<vmem>>, vector<1x64x32xbf16>
    %96 = vector.shape_cast %95 : vector<1x64x32xbf16> to vector<64x32xbf16>
    %97 = arith.truncf %94 : vector<8x64xf32> to vector<8x64xbf16>
    %cst_49 = arith.constant dense<0.000000e+00> : vector<8x32xf32>
    %98 = tpu.matmul %97, %96, %cst_49 {dimension_numbers = #tpu.dot_dimension_numbers<[1], [0], [0], [1], [0, 0, 1, 1], [], []>} : vector<8x64xbf16>, vector<64x32xbf16>, vector<8x32xf32> -> vector<8x32xf32>
    %c0_50 = arith.constant 0 : index
    %c0_51 = arith.constant 0 : index
    %c0_52 = arith.constant 0 : index
    %99 = vector.load %arg15[%c0_50, %c0_51, %c0_52] : memref<1x1x32xf32, #tpu.memory_space<vmem>>, vector<1x1x32xf32>
    %100 = vector.shape_cast %99 : vector<1x1x32xf32> to vector<1x32xf32>
    %101 = vector.broadcast %100 : vector<1x32xf32> to vector<8x32xf32>
    %102 = arith.addf %98, %101 : vector<8x32xf32>
    %103 = arith.addf %102, %73 : vector<8x32xf32>
    %c0_53 = arith.constant 0 : index
    %c0_54 = arith.constant 0 : index
    %c0_55 = arith.constant 0 : index
    %104 = vector.load %arg16[%c0_53, %c0_54, %c0_55] : memref<1x1x32xf32, #tpu.memory_space<vmem>>, vector<1x1x32xf32>
    %105 = vector.shape_cast %104 : vector<1x1x32xf32> to vector<1x32xf32>
    %c0_56 = arith.constant 0 : index
    %c0_57 = arith.constant 0 : index
    %c0_58 = arith.constant 0 : index
    %106 = vector.load %arg17[%c0_56, %c0_57, %c0_58] : memref<1x1x32xf32, #tpu.memory_space<vmem>>, vector<1x1x32xf32>
    %107 = vector.shape_cast %106 : vector<1x1x32xf32> to vector<1x32xf32>
    %cst_59 = arith.constant dense<0.000000e+00> : vector<8xf32>
    %108 = vector.multi_reduction <add>, %103, %cst_59 [1] : vector<8x32xf32> to vector<8xf32>
    %109 = vector.shape_cast %108 : vector<8xf32> to vector<8x1xf32>
    %cst_60 = arith.constant 3.200000e+01 : f32
    %110 = vector.broadcast %cst_60 : f32 to vector<8x1xf32>
    %111 = arith.divf %109, %110 : vector<8x1xf32>
    %112 = vector.broadcast %111 : vector<8x1xf32> to vector<8x32xf32>
    %113 = arith.subf %103, %112 : vector<8x32xf32>
    %114 = arith.mulf %113, %113 : vector<8x32xf32>
    %cst_61 = arith.constant dense<0.000000e+00> : vector<8xf32>
    %115 = vector.multi_reduction <add>, %114, %cst_61 [1] : vector<8x32xf32> to vector<8xf32>
    %116 = vector.shape_cast %115 : vector<8xf32> to vector<8x1xf32>
    %cst_62 = arith.constant 3.200000e+01 : f32
    %117 = vector.broadcast %cst_62 : f32 to vector<8x1xf32>
    %118 = arith.divf %116, %117 : vector<8x1xf32>
    %119 = vector.broadcast %111 : vector<8x1xf32> to vector<8x32xf32>
    %120 = arith.subf %103, %119 : vector<8x32xf32>
    %cst_63 = arith.constant 9.99999996E-13 : f32
    %121 = vector.broadcast %cst_63 : f32 to vector<8x1xf32>
    %122 = arith.addf %118, %121 : vector<8x1xf32>
    %123 = math.rsqrt %122 : vector<8x1xf32>
    %124 = vector.broadcast %123 : vector<8x1xf32> to vector<8x32xf32>
    %125 = arith.mulf %120, %124 : vector<8x32xf32>
    %126 = vector.broadcast %105 : vector<1x32xf32> to vector<8x32xf32>
    %127 = arith.mulf %125, %126 : vector<8x32xf32>
    %128 = vector.broadcast %107 : vector<1x32xf32> to vector<8x32xf32>
    %129 = arith.addf %127, %128 : vector<8x32xf32>
    %c0_64 = arith.constant 0 : index
    %c0_65 = arith.constant 0 : index
    %130 = vector.load %arg19[%c0_64, %c0_65] : memref<8x32xf32, #tpu.memory_space<vmem>>, vector<8x32xf32>
    tpu.vector_store %arg19[%c0_64, %c0_65], %129 {strides = array<i32>} : memref<8x32xf32, #tpu.memory_space<vmem>>, vector<8x32xf32>,
    %c1_i32 = arith.constant 1 : i32
    %131 = arith.cmpi eq, %arg1, %c1_i32 : i32
    %132 = arith.extui %131 : i1 to i32
    %c0_i32_66 = arith.constant 0 : i32
    %133 = arith.cmpi ne, %132, %c0_i32_66 : i32
    scf.if %133 {
      %134 = arith.truncf %129 : vector<8x32xf32> to vector<8x32xbf16>
      %c0_67 = arith.constant 0 : index
      %c0_68 = arith.constant 0 : index
      %c0_69 = arith.constant 0 : index
      %135 = vector.load %arg18[%c0_67, %c0_68, %c0_69] : memref<1x8x32xbf16, #tpu.memory_space<vmem>>, vector<1x8x32xbf16>
      %136 = vector.shape_cast %135 : vector<1x8x32xbf16> to vector<8x32xbf16>
      %137 = vector.shape_cast %134 : vector<8x32xbf16> to vector<1x8x32xbf16>
      tpu.vector_store %arg18[%c0_67, %c0_68, %c0_69], %137 {strides = array<i32>} : memref<1x8x32xbf16, #tpu.memory_space<vmem>>, vector<1x8x32xbf16>,
    } else {
    }
    return
  }
  func.func @transform_0(%arg0: i32, %arg1: i32) -> (i32, i32, i32) {
    %c0_i32 = arith.constant 0 : i32
    %c0_i32_0 = arith.constant 0 : i32
    %c0_i32_1 = arith.constant 0 : i32
    return %arg0, %c0_i32, %c0_i32_0 : i32, i32, i32
  }
  func.func @transform_1(%arg0: i32, %arg1: i32) -> (i32, i32, i32) {
    %c0_i32 = arith.constant 0 : i32
    %c0_i32_0 = arith.constant 0 : i32
    %c0_i32_1 = arith.constant 0 : i32
    return %arg0, %c0_i32, %c0_i32_0 : i32, i32, i32
  }
  func.func @transform_2(%arg0: i32, %arg1: i32) -> (i32, i32) {
    %c0_i32 = arith.constant 0 : i32
    %c0_i32_0 = arith.constant 0 : i32
    %c0_i32_1 = arith.constant 0 : i32
    return %c0_i32, %c0_i32_0 : i32, i32
  }
  func.func @transform_3(%arg0: i32, %arg1: i32) -> (i32, i32) {
    %c0_i32 = arith.constant 0 : i32
    %c0_i32_0 = arith.constant 0 : i32
    %c0_i32_1 = arith.constant 0 : i32
    return %c0_i32, %c0_i32_0 : i32, i32
  }
  func.func @transform_4(%arg0: i32, %arg1: i32) -> (i32, i32, i32) {
    %c0_i32 = arith.constant 0 : i32
    %c0_i32_0 = arith.constant 0 : i32
    %c0_i32_1 = arith.constant 0 : i32
    return %arg1, %c0_i32, %c0_i32_0 : i32, i32, i32
  }
  func.func @transform_5(%arg0: i32, %arg1: i32) -> (i32, i32, i32) {
    %c0_i32 = arith.constant 0 : i32
    %c0_i32_0 = arith.constant 0 : i32
    %c0_i32_1 = arith.constant 0 : i32
    return %arg1, %c0_i32, %c0_i32_0 : i32, i32, i32
  }
  func.func @transform_6(%arg0: i32, %arg1: i32) -> (i32, i32, i32, i32) {
    %c0_i32 = arith.constant 0 : i32
    %c0_i32_0 = arith.constant 0 : i32
    %c0_i32_1 = arith.constant 0 : i32
    %c0_i32_2 = arith.constant 0 : i32
    return %arg1, %c0_i32, %c0_i32_0, %c0_i32_1 : i32, i32, i32, i32
  }
  func.func @transform_7(%arg0: i32, %arg1: i32) -> (i32, i32, i32) {
    %c0_i32 = arith.constant 0 : i32
    %c0_i32_0 = arith.constant 0 : i32
    %c0_i32_1 = arith.constant 0 : i32
    return %arg1, %c0_i32, %c0_i32_0 : i32, i32, i32
  }
  func.func @transform_8(%arg0: i32, %arg1: i32) -> (i32, i32, i32) {
    %c0_i32 = arith.constant 0 : i32
    %c0_i32_0 = arith.constant 0 : i32
    %c0_i32_1 = arith.constant 0 : i32
    return %arg1, %c0_i32, %c0_i32_0 : i32, i32, i32
  }
  func.func @transform_9(%arg0: i32, %arg1: i32) -> (i32, i32, i32) {
    %c0_i32 = arith.constant 0 : i32
    %c0_i32_0 = arith.constant 0 : i32
    %c0_i32_1 = arith.constant 0 : i32
    return %arg1, %c0_i32, %c0_i32_0 : i32, i32, i32
  }
  func.func @transform_10(%arg0: i32, %arg1: i32) -> (i32, i32, i32) {
    %c0_i32 = arith.constant 0 : i32
    %c0_i32_0 = arith.constant 0 : i32
    %c0_i32_1 = arith.constant 0 : i32
    return %arg1, %c0_i32, %c0_i32_0 : i32, i32, i32
  }
  func.func @transform_11(%arg0: i32, %arg1: i32) -> (i32, i32, i32) {
    %c0_i32 = arith.constant 0 : i32
    %c0_i32_0 = arith.constant 0 : i32
    %c0_i32_1 = arith.constant 0 : i32
    return %arg1, %c0_i32, %c0_i32_0 : i32, i32, i32
  }
  func.func @transform_12(%arg0: i32, %arg1: i32) -> (i32, i32, i32) {
    %c0_i32 = arith.constant 0 : i32
    %c0_i32_0 = arith.constant 0 : i32
    %c0_i32_1 = arith.constant 0 : i32
    return %arg1, %c0_i32, %c0_i32_0 : i32, i32, i32
  }
  func.func @transform_13(%arg0: i32, %arg1: i32) -> (i32, i32, i32) {
    %c0_i32 = arith.constant 0 : i32
    %c0_i32_0 = arith.constant 0 : i32
    %c0_i32_1 = arith.constant 0 : i32
    return %arg1, %c0_i32, %c0_i32_0 : i32, i32, i32
  }
  func.func @transform_14(%arg0: i32, %arg1: i32) -> (i32, i32, i32) {
    %c0_i32 = arith.constant 0 : i32
    %c0_i32_0 = arith.constant 0 : i32
    %c0_i32_1 = arith.constant 0 : i32
    return %arg1, %c0_i32, %c0_i32_0 : i32, i32, i32
  }
  func.func @transform_15(%arg0: i32, %arg1: i32) -> (i32, i32, i32) {
    %c0_i32 = arith.constant 0 : i32
    %c0_i32_0 = arith.constant 0 : i32
    %c0_i32_1 = arith.constant 0 : i32
    return %arg1, %c0_i32, %c0_i32_0 : i32, i32, i32
  }
  func.func @transform_16(%arg0: i32, %arg1: i32) -> (i32, i32, i32) {
    %c0_i32 = arith.constant 0 : i32
    %c0_i32_0 = arith.constant 0 : i32
    %c0_i32_1 = arith.constant 0 : i32
    return %arg0, %c0_i32, %c0_i32_0 : i32, i32, i32
  }
}

</mosaic_0001>

<llo_original>
// kernel: bert_embed.1
$region0: #{bert_embed.1}
  #allocation0 [shape = 'u32[]', space=smem, size = 0x4, offset = 0x4, fixed_abs, tag = 'smem constant byte address 0x4 - core index']
  #allocation1 [shape = 'u32[144,128]{1,0:T(1,128)}', space=vmem, size = 0x12000, scoped, tag = 'internal scratch']
  #allocation2 [shape = 'f32[8,32]{1,0:T(8,128)}', space=vmem, size = 0x1000, scoped, tag = 'scratch operand']
  %s0 = inlined_call_operand.vmem [shape: bf16[2,8,32], index: 0, kind: input, shape index: {}]
  %s1 = inlined_call_operand.vmem [shape: f32[2,1,8], index: 1, kind: input, shape index: {}]
  %s2 = inlined_call_operand.vmem [shape: f32[1,32], index: 2, kind: input, shape index: {}]
  %s3 = inlined_call_operand.vmem [shape: f32[1,32], index: 3, kind: input, shape index: {}]
  %s4 = inlined_call_operand.vmem [shape: bf16[2,32,96], index: 4, kind: input, shape index: {}]
  %s5 = inlined_call_operand.vmem [shape: f32[2,1,96], index: 5, kind: input, shape index: {}]
  %s6 = inlined_call_operand.vmem [shape: bf16[2,4,8,32], index: 6, kind: input, shape index: {}]
  %s7 = inlined_call_operand.vmem [shape: f32[2,1,32], index: 7, kind: input, shape index: {}]
  %s8 = inlined_call_operand.vmem [shape: f32[2,1,32], index: 8, kind: input, shape index: {}]
  %s9 = inlined_call_operand.vmem [shape: f32[2,1,32], index: 9, kind: input, shape index: {}]
  %s10 = inlined_call_operand.vmem [shape: bf16[2,32,64], index: 10, kind: input, shape index: {}]
  %s11 = inlined_call_operand.vmem [shape: f32[2,1,64], index: 11, kind: input, shape index: {}]
  %s12 = inlined_call_operand.vmem [shape: bf16[2,64,32], index: 12, kind: input, shape index: {}]
  %s13 = inlined_call_operand.vmem [shape: f32[2,1,32], index: 13, kind: input, shape index: {}]
  %s14 = inlined_call_operand.vmem [shape: f32[2,1,32], index: 14, kind: input, shape index: {}]
  %s15 = inlined_call_operand.vmem [shape: f32[2,1,32], index: 15, kind: input, shape index: {}]
  %s16 = inlined_call_operand.hbm [shape: bf16[2,8,32], index: 16, kind: output, shape index: {}]
  %s17 = sld [smem:[#allocation0]]
  $region105: #{bert_embed.1} parent=0
    _
  %s19 = ssub.s32 1, %s17
  %s20 = scalar_select 0, %s19, %s17
  $region1: #{bert_embed.1} parent=0
    #allocation3 [shape = 'u8[4096]{0}', space=vmem, size = 0x1000, scoped, tag = 'output window, operand 0']
    #allocation4 [shape = 's32[2]{0}', space=sflag, size = 0x8, scoped, tag = 'scoped memory for bert_embed.1']
    %21 = vsyncpa [#allocation4], 0
    %s22 = scalar_lea.sflag [#allocation4], 1
    %23 = vsyncpa %s22, 0
    loop: start=0, step=1, limit=6
    $region2: #{bert_embed.1} parent=1 // loop_pre_header
      _
    $region3: #{bert_embed.1} parent=1 // loop_header
      %s25 = sphi 0, %s29
      %p26 = scmp.ge.s32.totalorder %s25, 6
      %s32 = sphi 0, %s44
      %s33 = sphi 0, %s40
      %s34 = sphi 0, %s32
      %s35 = sphi 0, %s33
      %s36 = sphi 0, %s34
      %s37 = sphi 0, %s35
      %s47 = sphi 0, %s49
      %s50 = sphi 0, %s47
      %s51 = sphi 0, %s50
      %s67 = sphi 0, %s51
      %s73 = sphi 0, %s75
      %s76 = sphi 0, %s73
      %s77 = sphi 0, %s76
      %s93 = sphi 0, %s77
      %s97 = sphi 0, %s97
      %s99 = sphi 0, %s97
      %s100 = sphi 0, %s99
      %s114 = sphi 0, %s100
      %s118 = sphi 0, %s118
      %s120 = sphi 0, %s118
      %s121 = sphi 0, %s120
      %s135 = sphi 0, %s121
      %s141 = sphi 0, %s143
      %s144 = sphi 0, %s141
      %s145 = sphi 0, %s144
      %s161 = sphi 0, %s145
      %s167 = sphi 0, %s169
      %s170 = sphi 0, %s167
      %s171 = sphi 0, %s170
      %s187 = sphi 0, %s171
      %s193 = sphi 0, %s195
      %s196 = sphi 0, %s193
      %s197 = sphi 0, %s196
      %s213 = sphi 0, %s197
      %s219 = sphi 0, %s221
      %s222 = sphi 0, %s219
      %s223 = sphi 0, %s222
      %s239 = sphi 0, %s223
      %s245 = sphi 0, %s247
      %s248 = sphi 0, %s245
      %s249 = sphi 0, %s248
      %s265 = sphi 0, %s249
      %s271 = sphi 0, %s273
      %s274 = sphi 0, %s271
      %s275 = sphi 0, %s274
      %s291 = sphi 0, %s275
      %s297 = sphi 0, %s299
      %s300 = sphi 0, %s297
      %s301 = sphi 0, %s300
      %s317 = sphi 0, %s301
      %s323 = sphi 0, %s325
      %s326 = sphi 0, %s323
      %s327 = sphi 0, %s326
      %s343 = sphi 0, %s327
      %s349 = sphi 0, %s351
      %s352 = sphi 0, %s349
      %s353 = sphi 0, %s352
      %s369 = sphi 0, %s353
      %s375 = sphi 0, %s377
      %s378 = sphi 0, %s375
      %s379 = sphi 0, %s378
      %s395 = sphi 0, %s379
      %s401 = sphi 0, %s403
      %s404 = sphi 0, %s401
      %s405 = sphi 0, %s404
      %s421 = sphi 0, %s405
      %s427 = sphi 0, %s429
      %s430 = sphi 0, %s427
      %s431 = sphi 0, %s430
      %s447 = sphi 0, %s431
      %s453 = sphi 0, %s455
      %s456 = sphi 0, %s453
      %s457 = sphi 0, %s456
      %s473 = sphi 0, %s457
    $region4: #{bert_embed.1} parent=1 // loop_header_branch
      %28 = sbr.rel (%p26) target = $region8
    $region5: #{bert_embed.1} parent=1 // loop_body
      %s30 = ssub.s32 %s25, 1
      %s31 = ssub.s32 %s25, 2
      %s38 = sadd.s32 1, %s33
      %p39 = scmp.ge.s32.totalorder %s38, 2
      %s40 = scalar_select %p39, 0, %s38
      %s41 = sadd.s32 1, %s32
      %s42 = scalar_select %p39, %s41, %s32
      %p43 = scmp.ge.s32.totalorder %s42, 2
      %s44 = scalar_select %p43, 0, %s42
      %s45 = ssub.s32 %s32, %s44
      %p46 = scmp.eq.s32.totalorder %s45, 0
      %s48 = sadd.s32 %s47, 1
      %s49 = scalar_select %p46, %s47, %s48
      %p52 = pneg %p46
      %p53 = scmp.eq.s32.totalorder %s25, 3
      %p54 = por %p52, %p53
      %p55 = scmp.ne.s32.totalorder %s47, %s50
      %p56 = scmp.eq.s32.totalorder %s25, 0
      %p57 = por %p55, %p56
      %p58 = scmp.ne.s32.totalorder %s47, %s50
      %p59 = scmp.eq.s32.totalorder %s30, 3
      %p60 = por %p58, %p59
      %p61 = scmp.ne.s32.totalorder %s50, %s51
      %p62 = scmp.eq.s32.totalorder %s30, 0
      %p63 = por %p61, %p62
      %p64 = scmp.ne.s32.totalorder %s50, %s51
      %p65 = scmp.eq.s32.totalorder %s31, 3
      %p66 = por %p64, %p65
      %p68 = scmp.ne.s32.totalorder %s51, %s67
      %p69 = scmp.eq.s32.totalorder %s31, 0
      %p70 = por %p68, %p69
      %s71 = ssub.s32 %s32, %s44
      %p72 = scmp.eq.s32.totalorder %s71, 0
      %s74 = sadd.s32 %s73, 1
      %s75 = scalar_select %p72, %s73, %s74
      %p78 = pneg %p72
      %p79 = scmp.eq.s32.totalorder %s25, 3
      %p80 = por %p78, %p79
      %p81 = scmp.ne.s32.totalorder %s73, %s76
      %p82 = scmp.eq.s32.totalorder %s25, 0
      %p83 = por %p81, %p82
      %p84 = scmp.ne.s32.totalorder %s73, %s76
      %p85 = scmp.eq.s32.totalorder %s30, 3
      %p86 = por %p84, %p85
      %p87 = scmp.ne.s32.totalorder %s76, %s77
      %p88 = scmp.eq.s32.totalorder %s30, 0
      %p89 = por %p87, %p88
      %p90 = scmp.ne.s32.totalorder %s76, %s77
      %p91 = scmp.eq.s32.totalorder %s31, 3
      %p92 = por %p90, %p91
      %p94 = scmp.ne.s32.totalorder %s77, %s93
      %p95 = scmp.eq.s32.totalorder %s31, 0
      %p96 = por %p94, %p95
      %s98 = sadd.s32 %s97, 1
      %p101 = scmp.eq.s32.totalorder %s25, 3
      %p102 = scmp.ne.s32.totalorder %s97, %s99
      %p103 = scmp.eq.s32.totalorder %s25, 0
      %p104 = por %p102, %p103
      %p105 = scmp.ne.s32.totalorder %s97, %s99
      %p106 = scmp.eq.s32.totalorder %s30, 3
      %p107 = por %p105, %p106
      %p108 = scmp.ne.s32.totalorder %s99, %s100
      %p109 = scmp.eq.s32.totalorder %s30, 0
      %p110 = por %p108, %p109
      %p111 = scmp.ne.s32.totalorder %s99, %s100
      %p112 = scmp.eq.s32.totalorder %s31, 3
      %p113 = por %p111, %p112
      %p115 = scmp.ne.s32.totalorder %s100, %s114
      %p116 = scmp.eq.s32.totalorder %s31, 0
      %p117 = por %p115, %p116
      %s119 = sadd.s32 %s118, 1
      %p122 = scmp.eq.s32.totalorder %s25, 3
      %p123 = scmp.ne.s32.totalorder %s118, %s120
      %p124 = scmp.eq.s32.totalorder %s25, 0
      %p125 = por %p123, %p124
      %p126 = scmp.ne.s32.totalorder %s118, %s120
      %p127 = scmp.eq.s32.totalorder %s30, 3
      %p128 = por %p126, %p127
      %p129 = scmp.ne.s32.totalorder %s120, %s121
      %p130 = scmp.eq.s32.totalorder %s30, 0
      %p131 = por %p129, %p130
      %p132 = scmp.ne.s32.totalorder %s120, %s121
      %p133 = scmp.eq.s32.totalorder %s31, 3
      %p134 = por %p132, %p133
      %p136 = scmp.ne.s32.totalorder %s121, %s135
      %p137 = scmp.eq.s32.totalorder %s31, 0
      %p138 = por %p136, %p137
      %s139 = ssub.s32 %s33, %s40
      %p140 = scmp.eq.s32.totalorder %s139, 0
      %s142 = sadd.s32 %s141, 1
      %s143 = scalar_select %p140, %s141, %s142
      %p146 = pneg %p140
      %p147 = scmp.eq.s32.totalorder %s25, 3
      %p148 = por %p146, %p147
      %p149 = scmp.ne.s32.totalorder %s141, %s144
      %p150 = scmp.eq.s32.totalorder %s25, 0
      %p151 = por %p149, %p150
      %p152 = scmp.ne.s32.totalorder %s141, %s144
      %p153 = scmp.eq.s32.totalorder %s30, 3
      %p154 = por %p152, %p153
      %p155 = scmp.ne.s32.totalorder %s144, %s145
      %p156 = scmp.eq.s32.totalorder %s30, 0
      %p157 = por %p155, %p156
      %p158 = scmp.ne.s32.totalorder %s144, %s145
      %p159 = scmp.eq.s32.totalorder %s31, 3
      %p160 = por %p158, %p159
      %p162 = scmp.ne.s32.totalorder %s145, %s161
      %p163 = scmp.eq.s32.totalorder %s31, 0
      %p164 = por %p162, %p163
      %s165 = ssub.s32 %s33, %s40
      %p166 = scmp.eq.s32.totalorder %s165, 0
      %s168 = sadd.s32 %s167, 1
      %s169 = scalar_select %p166, %s167, %s168
      %p172 = pneg %p166
      %p173 = scmp.eq.s32.totalorder %s25, 3
      %p174 = por %p172, %p173
      %p175 = scmp.ne.s32.totalorder %s167, %s170
      %p176 = scmp.eq.s32.totalorder %s25, 0
      %p177 = por %p175, %p176
      %p178 = scmp.ne.s32.totalorder %s167, %s170
      %p179 = scmp.eq.s32.totalorder %s30, 3
      %p180 = por %p178, %p179
      %p181 = scmp.ne.s32.totalorder %s170, %s171
      %p182 = scmp.eq.s32.totalorder %s30, 0
      %p183 = por %p181, %p182
      %p184 = scmp.ne.s32.totalorder %s170, %s171
      %p185 = scmp.eq.s32.totalorder %s31, 3
      %p186 = por %p184, %p185
      %p188 = scmp.ne.s32.totalorder %s171, %s187
      %p189 = scmp.eq.s32.totalorder %s31, 0
      %p190 = por %p188, %p189
      %s191 = ssub.s32 %s33, %s40
      %p192 = scmp.eq.s32.totalorder %s191, 0
      %s194 = sadd.s32 %s193, 1
      %s195 = scalar_select %p192, %s193, %s194
      %p198 = pneg %p192
      %p199 = scmp.eq.s32.totalorder %s25, 3
      %p200 = por %p198, %p199
      %p201 = scmp.ne.s32.totalorder %s193, %s196
      %p202 = scmp.eq.s32.totalorder %s25, 0
      %p203 = por %p201, %p202
      %p204 = scmp.ne.s32.totalorder %s193, %s196
      %p205 = scmp.eq.s32.totalorder %s30, 3
      %p206 = por %p204, %p205
      %p207 = scmp.ne.s32.totalorder %s196, %s197
      %p208 = scmp.eq.s32.totalorder %s30, 0
      %p209 = por %p207, %p208
      %p210 = scmp.ne.s32.totalorder %s196, %s197
      %p211 = scmp.eq.s32.totalorder %s31, 3
      %p212 = por %p210, %p211
      %p214 = scmp.ne.s32.totalorder %s197, %s213
      %p215 = scmp.eq.s32.totalorder %s31, 0
      %p216 = por %p214, %p215
      %s217 = ssub.s32 %s33, %s40
      %p218 = scmp.eq.s32.totalorder %s217, 0
      %s220 = sadd.s32 %s219, 1
      %s221 = scalar_select %p218, %s219, %s220
      %p224 = pneg %p218
      %p225 = scmp.eq.s32.totalorder %s25, 3
      %p226 = por %p224, %p225
      %p227 = scmp.ne.s32.totalorder %s219, %s222
      %p228 = scmp.eq.s32.totalorder %s25, 0
      %p229 = por %p227, %p228
      %p230 = scmp.ne.s32.totalorder %s219, %s222
      %p231 = scmp.eq.s32.totalorder %s30, 3
      %p232 = por %p230, %p231
      %p233 = scmp.ne.s32.totalorder %s222, %s223
      %p234 = scmp.eq.s32.totalorder %s30, 0
      %p235 = por %p233, %p234
      %p236 = scmp.ne.s32.totalorder %s222, %s223
      %p237 = scmp.eq.s32.totalorder %s31, 3
      %p238 = por %p236, %p237
      %p240 = scmp.ne.s32.totalorder %s223, %s239
      %p241 = scmp.eq.s32.totalorder %s31, 0
      %p242 = por %p240, %p241
      %s243 = ssub.s32 %s33, %s40
      %p244 = scmp.eq.s32.totalorder %s243, 0
      %s246 = sadd.s32 %s245, 1
      %s247 = scalar_select %p244, %s245, %s246
      %p250 = pneg %p244
      %p251 = scmp.eq.s32.totalorder %s25, 3
      %p252 = por %p250, %p251
      %p253 = scmp.ne.s32.totalorder %s245, %s248
      %p254 = scmp.eq.s32.totalorder %s25, 0
      %p255 = por %p253, %p254
      %p256 = scmp.ne.s32.totalorder %s245, %s248
      %p257 = scmp.eq.s32.totalorder %s30, 3
      %p258 = por %p256, %p257
      %p259 = scmp.ne.s32.totalorder %s248, %s249
      %p260 = scmp.eq.s32.totalorder %s30, 0
      %p261 = por %p259, %p260
      %p262 = scmp.ne.s32.totalorder %s248, %s249
      %p263 = scmp.eq.s32.totalorder %s31, 3
      %p264 = por %p262, %p263
      %p266 = scmp.ne.s32.totalorder %s249, %s265
      %p267 = scmp.eq.s32.totalorder %s31, 0
      %p268 = por %p266, %p267
      %s269 = ssub.s32 %s33, %s40
      %p270 = scmp.eq.s32.totalorder %s269, 0
      %s272 = sadd.s32 %s271, 1
      %s273 = scalar_select %p270, %s271, %s272
      %p276 = pneg %p270
      %p277 = scmp.eq.s32.totalorder %s25, 3
      %p278 = por %p276, %p277
      %p279 = scmp.ne.s32.totalorder %s271, %s274
      %p280 = scmp.eq.s32.totalorder %s25, 0
      %p281 = por %p279, %p280
      %p282 = scmp.ne.s32.totalorder %s271, %s274
      %p283 = scmp.eq.s32.totalorder %s30, 3
      %p284 = por %p282, %p283
      %p285 = scmp.ne.s32.totalorder %s274, %s275
      %p286 = scmp.eq.s32.totalorder %s30, 0
      %p287 = por %p285, %p286
      %p288 = scmp.ne.s32.totalorder %s274, %s275
      %p289 = scmp.eq.s32.totalorder %s31, 3
      %p290 = por %p288, %p289
      %p292 = scmp.ne.s32.totalorder %s275, %s291
      %p293 = scmp.eq.s32.totalorder %s31, 0
      %p294 = por %p292, %p293
      %s295 = ssub.s32 %s33, %s40
      %p296 = scmp.eq.s32.totalorder %s295, 0
      %s298 = sadd.s32 %s297, 1
      %s299 = scalar_select %p296, %s297, %s298
      %p302 = pneg %p296
      %p303 = scmp.eq.s32.totalorder %s25, 3
      %p304 = por %p302, %p303
      %p305 = scmp.ne.s32.totalorder %s297, %s300
      %p306 = scmp.eq.s32.totalorder %s25, 0
      %p307 = por %p305, %p306
      %p308 = scmp.ne.s32.totalorder %s297, %s300
      %p309 = scmp.eq.s32.totalorder %s30, 3
      %p310 = por %p308, %p309
      %p311 = scmp.ne.s32.totalorder %s300, %s301
      %p312 = scmp.eq.s32.totalorder %s30, 0
      %p313 = por %p311, %p312
      %p314 = scmp.ne.s32.totalorder %s300, %s301
      %p315 = scmp.eq.s32.totalorder %s31, 3
      %p316 = por %p314, %p315
      %p318 = scmp.ne.s32.totalorder %s301, %s317
      %p319 = scmp.eq.s32.totalorder %s31, 0
      %p320 = por %p318, %p319
      %s321 = ssub.s32 %s33, %s40
      %p322 = scmp.eq.s32.totalorder %s321, 0
      %s324 = sadd.s32 %s323, 1
      %s325 = scalar_select %p322, %s323, %s324
      %p328 = pneg %p322
      %p329 = scmp.eq.s32.totalorder %s25, 3
      %p330 = por %p328, %p329
      %p331 = scmp.ne.s32.totalorder %s323, %s326
      %p332 = scmp.eq.s32.totalorder %s25, 0
      %p333 = por %p331, %p332
      %p334 = scmp.ne.s32.totalorder %s323, %s326
      %p335 = scmp.eq.s32.totalorder %s30, 3
      %p336 = por %p334, %p335
      %p337 = scmp.ne.s32.totalorder %s326, %s327
      %p338 = scmp.eq.s32.totalorder %s30, 0
      %p339 = por %p337, %p338
      %p340 = scmp.ne.s32.totalorder %s326, %s327
      %p341 = scmp.eq.s32.totalorder %s31, 3
      %p342 = por %p340, %p341
      %p344 = scmp.ne.s32.totalorder %s327, %s343
      %p345 = scmp.eq.s32.totalorder %s31, 0
      %p346 = por %p344, %p345
      %s347 = ssub.s32 %s33, %s40
      %p348 = scmp.eq.s32.totalorder %s347, 0
      %s350 = sadd.s32 %s349, 1
      %s351 = scalar_select %p348, %s349, %s350
      %p354 = pneg %p348
      %p355 = scmp.eq.s32.totalorder %s25, 3
      %p356 = por %p354, %p355
      %p357 = scmp.ne.s32.totalorder %s349, %s352
      %p358 = scmp.eq.s32.totalorder %s25, 0
      %p359 = por %p357, %p358
      %p360 = scmp.ne.s32.totalorder %s349, %s352
      %p361 = scmp.eq.s32.totalorder %s30, 3
      %p362 = por %p360, %p361
      %p363 = scmp.ne.s32.totalorder %s352, %s353
      %p364 = scmp.eq.s32.totalorder %s30, 0
      %p365 = por %p363, %p364
      %p366 = scmp.ne.s32.totalorder %s352, %s353
      %p367 = scmp.eq.s32.totalorder %s31, 3
      %p368 = por %p366, %p367
      %p370 = scmp.ne.s32.totalorder %s353, %s369
      %p371 = scmp.eq.s32.totalorder %s31, 0
      %p372 = por %p370, %p371
      %s373 = ssub.s32 %s33, %s40
      %p374 = scmp.eq.s32.totalorder %s373, 0
      %s376 = sadd.s32 %s375, 1
      %s377 = scalar_select %p374, %s375, %s376
      %p380 = pneg %p374
      %p381 = scmp.eq.s32.totalorder %s25, 3
      %p382 = por %p380, %p381
      %p383 = scmp.ne.s32.totalorder %s375, %s378
      %p384 = scmp.eq.s32.totalorder %s25, 0
      %p385 = por %p383, %p384
      %p386 = scmp.ne.s32.totalorder %s375, %s378
      %p387 = scmp.eq.s32.totalorder %s30, 3
      %p388 = por %p386, %p387
      %p389 = scmp.ne.s32.totalorder %s378, %s379
      %p390 = scmp.eq.s32.totalorder %s30, 0
      %p391 = por %p389, %p390
      %p392 = scmp.ne.s32.totalorder %s378, %s379
      %p393 = scmp.eq.s32.totalorder %s31, 3
      %p394 = por %p392, %p393
      %p396 = scmp.ne.s32.totalorder %s379, %s395
      %p397 = scmp.eq.s32.totalorder %s31, 0
      %p398 = por %p396, %p397
      %s399 = ssub.s32 %s33, %s40
      %p400 = scmp.eq.s32.totalorder %s399, 0
      %s402 = sadd.s32 %s401, 1
      %s403 = scalar_select %p400, %s401, %s402
      %p406 = pneg %p400
      %p407 = scmp.eq.s32.totalorder %s25, 3
      %p408 = por %p406, %p407
      %p409 = scmp.ne.s32.totalorder %s401, %s404
      %p410 = scmp.eq.s32.totalorder %s25, 0
      %p411 = por %p409, %p410
      %p412 = scmp.ne.s32.totalorder %s401, %s404
      %p413 = scmp.eq.s32.totalorder %s30, 3
      %p414 = por %p412, %p413
      %p415 = scmp.ne.s32.totalorder %s404, %s405
      %p416 = scmp.eq.s32.totalorder %s30, 0
      %p417 = por %p415, %p416
      %p418 = scmp.ne.s32.totalorder %s404, %s405
      %p419 = scmp.eq.s32.totalorder %s31, 3
      %p420 = por %p418, %p419
      %p422 = scmp.ne.s32.totalorder %s405, %s421
      %p423 = scmp.eq.s32.totalorder %s31, 0
      %p424 = por %p422, %p423
      %s425 = ssub.s32 %s33, %s40
      %p426 = scmp.eq.s32.totalorder %s425, 0
      %s428 = sadd.s32 %s427, 1
      %s429 = scalar_select %p426, %s427, %s428
      %p432 = pneg %p426
      %p433 = scmp.eq.s32.totalorder %s25, 3
      %p434 = por %p432, %p433
      %p435 = scmp.ne.s32.totalorder %s427, %s430
      %p436 = scmp.eq.s32.totalorder %s25, 0
      %p437 = por %p435, %p436
      %p438 = scmp.ne.s32.totalorder %s427, %s430
      %p439 = scmp.eq.s32.totalorder %s30, 3
      %p440 = por %p438, %p439
      %p441 = scmp.ne.s32.totalorder %s430, %s431
      %p442 = scmp.eq.s32.totalorder %s30, 0
      %p443 = por %p441, %p442
      %p444 = scmp.ne.s32.totalorder %s430, %s431
      %p445 = scmp.eq.s32.totalorder %s31, 3
      %p446 = por %p444, %p445
      %p448 = scmp.ne.s32.totalorder %s431, %s447
      %p449 = scmp.eq.s32.totalorder %s31, 0
      %p450 = por %p448, %p449
      %s451 = ssub.s32 %s32, %s44
      %p452 = scmp.eq.s32.totalorder %s451, 0
      %s454 = sadd.s32 %s453, 1
      %s455 = scalar_select %p452, %s453, %s454
      %p458 = pneg %p452
      %p459 = scmp.eq.s32.totalorder %s25, 3
      %p460 = por %p458, %p459
      %p461 = scmp.ne.s32.totalorder %s453, %s456
      %p462 = scmp.eq.s32.totalorder %s25, 0
      %p463 = por %p461, %p462
      %p464 = scmp.ne.s32.totalorder %s453, %s456
      %p465 = scmp.eq.s32.totalorder %s30, 3
      %p466 = por %p464, %p465
      %p467 = scmp.ne.s32.totalorder %s456, %s457
      %p468 = scmp.eq.s32.totalorder %s30, 0
      %p469 = por %p467, %p468
      %p470 = scmp.ne.s32.totalorder %s456, %s457
      %p471 = scmp.eq.s32.totalorder %s31, 3
      %p472 = por %p470, %p471
      %p474 = scmp.ne.s32.totalorder %s457, %s473
      %p475 = scmp.eq.s32.totalorder %s31, 0
      %p476 = por %p474, %p475
      %p477 = scmp.le.s32.totalorder 1, %s25
      %p478 = scmp.lt.s32.totalorder %s25, 5
      %p479 = pnand %p477, %p478
      %p480 = pneg %p479
      // Predicated region
      $region9: #{bert_embed.1} parent=5 // pred_check
        _
      $region10: #{bert_embed.1} parent=5 // pred_check_branch
        %482 = sbr.rel (%p479) target = $region12
      $region11: #{bert_embed.1} parent=5 // pred_region
        %s483 = ssub.s32 %s25, 1
        // Predicated region
        $region13: #{bert_embed.1} parent=11 // pred_check
          %p484 = pneg %p110
        $region14: #{bert_embed.1} parent=11 // pred_check_branch
          %486 = sbr.rel (%p484) target = $region16
        $region15: #{bert_embed.1} parent=11 // pred_region
          _
        $region16: #{bert_embed.1} parent=11 // pred_fallthru
          _
        // Predicated region
        $region17: #{bert_embed.1} parent=11 // pred_check
          %p487 = pneg %p131
        $region18: #{bert_embed.1} parent=11 // pred_check_branch
          %489 = sbr.rel (%p487) target = $region20
        $region19: #{bert_embed.1} parent=11 // pred_region
          _
        $region20: #{bert_embed.1} parent=11 // pred_fallthru
          _
      $region12: #{bert_embed.1} parent=5 // pred_fallthru
        _
      %p490 = scmp.lt.s32.totalorder %s25, 4
      // Predicated region
      $region21: #{bert_embed.1} parent=5 // pred_check
        %p491 = pneg %p490
      $region22: #{bert_embed.1} parent=5 // pred_check_branch
        %493 = sbr.rel (%p491) target = $region24
      $region23: #{bert_embed.1} parent=5 // pred_region
        // Predicated region
        $region25: #{bert_embed.1} parent=23 // pred_check
          %p494 = pneg %p57
        $region26: #{bert_embed.1} parent=23 // pred_check_branch
          %496 = sbr.rel (%p494) target = $region28
        $region27: #{bert_embed.1} parent=23 // pred_region
          %p497 = scmp.lt.s32.totalorder %s32, 1
          %s498 = scalar_select %p497, %s32, 1
          %s499 = smul.addr %s498, 4
          %s500 = scalar_lea.vmem %s0, %s499
        $region28: #{bert_embed.1} parent=23 // pred_fallthru
          _
        // Predicated region
        $region29: #{bert_embed.1} parent=23 // pred_check
          %p501 = pneg %p83
        $region30: #{bert_embed.1} parent=23 // pred_check_branch
          %503 = sbr.rel (%p501) target = $region32
        $region31: #{bert_embed.1} parent=23 // pred_region
          %p504 = scmp.lt.s32.totalorder %s32, 1
          %s505 = scalar_select %p504, %s32, 1
          %s506 = scalar_lea.vmem %s1, %s505
        $region32: #{bert_embed.1} parent=23 // pred_fallthru
          _
        // Predicated region
        $region33: #{bert_embed.1} parent=23 // pred_check
          %p507 = pneg %p151
        $region34: #{bert_embed.1} parent=23 // pred_check_branch
          %509 = sbr.rel (%p507) target = $region36
        $region35: #{bert_embed.1} parent=23 // pred_region
          %p510 = scmp.lt.s32.totalorder %s33, 1
          %s511 = scalar_select %p510, %s33, 1
          %s512 = smul.addr %s511, 4
          %s513 = smul.addr %s512, 4
          %s514 = scalar_lea.vmem %s4, %s513
        $region36: #{bert_embed.1} parent=23 // pred_fallthru
          _
        // Predicated region
        $region37: #{bert_embed.1} parent=23 // pred_check
          %p515 = pneg %p177
        $region38: #{bert_embed.1} parent=23 // pred_check_branch
          %517 = sbr.rel (%p515) target = $region40
        $region39: #{bert_embed.1} parent=23 // pred_region
          %p518 = scmp.lt.s32.totalorder %s33, 1
          %s519 = scalar_select %p518, %s33, 1
          %s520 = scalar_lea.vmem %s5, %s519
        $region40: #{bert_embed.1} parent=23 // pred_fallthru
          _
        // Predicated region
        $region41: #{bert_embed.1} parent=23 // pred_check
          %p521 = pneg %p203
        $region42: #{bert_embed.1} parent=23 // pred_check_branch
          %523 = sbr.rel (%p521) target = $region44
        $region43: #{bert_embed.1} parent=23 // pred_region
          %p524 = scmp.lt.s32.totalorder %s33, 1
          %s525 = scalar_select %p524, %s33, 1
          %s526 = smul.addr %s525, 4
          %s527 = smul.addr %s526, 4
          %s528 = scalar_lea.vmem %s6, %s527
        $region44: #{bert_embed.1} parent=23 // pred_fallthru
          _
        // Predicated region
        $region45: #{bert_embed.1} parent=23 // pred_check
          %p529 = pneg %p229
        $region46: #{bert_embed.1} parent=23 // pred_check_branch
          %531 = sbr.rel (%p529) target = $region48
        $region47: #{bert_embed.1} parent=23 // pred_region
          %p532 = scmp.lt.s32.totalorder %s33, 1
          %s533 = scalar_select %p532, %s33, 1
          %s534 = scalar_lea.vmem %s7, %s533
        $region48: #{bert_embed.1} parent=23 // pred_fallthru
          _
        // Predicated region
        $region49: #{bert_embed.1} parent=23 // pred_check
          %p535 = pneg %p255
        $region50: #{bert_embed.1} parent=23 // pred_check_branch
          %537 = sbr.rel (%p535) target = $region52
        $region51: #{bert_embed.1} parent=23 // pred_region
          %p538 = scmp.lt.s32.totalorder %s33, 1
          %s539 = scalar_select %p538, %s33, 1
          %s540 = scalar_lea.vmem %s8, %s539
        $region52: #{bert_embed.1} parent=23 // pred_fallthru
          _
        // Predicated region
        $region53: #{bert_embed.1} parent=23 // pred_check
          %p541 = pneg %p281
        $region54: #{bert_embed.1} parent=23 // pred_check_branch
          %543 = sbr.rel (%p541) target = $region56
        $region55: #{bert_embed.1} parent=23 // pred_region
          %p544 = scmp.lt.s32.totalorder %s33, 1
          %s545 = scalar_select %p544, %s33, 1
          %s546 = scalar_lea.vmem %s9, %s545
        $region56: #{bert_embed.1} parent=23 // pred_fallthru
          _
        // Predicated region
        $region57: #{bert_embed.1} parent=23 // pred_check
          %p547 = pneg %p307
        $region58: #{bert_embed.1} parent=23 // pred_check_branch
          %549 = sbr.rel (%p547) target = $region60
        $region59: #{bert_embed.1} parent=23 // pred_region
          %p550 = scmp.lt.s32.totalorder %s33, 1
          %s551 = scalar_select %p550, %s33, 1
          %s552 = smul.addr %s551, 4
          %s553 = smul.addr %s552, 4
          %s554 = scalar_lea.vmem %s10, %s553
        $region60: #{bert_embed.1} parent=23 // pred_fallthru
          _
        // Predicated region
        $region61: #{bert_embed.1} parent=23 // pred_check
          %p555 = pneg %p333
        $region62: #{bert_embed.1} parent=23 // pred_check_branch
          %557 = sbr.rel (%p555) target = $region64
        $region63: #{bert_embed.1} parent=23 // pred_region
          %p558 = scmp.lt.s32.totalorder %s33, 1
          %s559 = scalar_select %p558, %s33, 1
          %s560 = scalar_lea.vmem %s11, %s559
        $region64: #{bert_embed.1} parent=23 // pred_fallthru
          _
        // Predicated region
        $region65: #{bert_embed.1} parent=23 // pred_check
          %p561 = pneg %p359
        $region66: #{bert_embed.1} parent=23 // pred_check_branch
          %563 = sbr.rel (%p561) target = $region68
        $region67: #{bert_embed.1} parent=23 // pred_region
          %p564 = scmp.lt.s32.totalorder %s33, 1
          %s565 = scalar_select %p564, %s33, 1
          %s566 = smul.addr %s565, 8
          %s567 = smul.addr %s566, 4
          %s568 = scalar_lea.vmem %s12, %s567
        $region68: #{bert_embed.1} parent=23 // pred_fallthru
          _
        // Predicated region
        $region69: #{bert_embed.1} parent=23 // pred_check
          %p569 = pneg %p385
        $region70: #{bert_embed.1} parent=23 // pred_check_branch
          %571 = sbr.rel (%p569) target = $region72
        $region71: #{bert_embed.1} parent=23 // pred_region
          %p572 = scmp.lt.s32.totalorder %s33, 1
          %s573 = scalar_select %p572, %s33, 1
          %s574 = scalar_lea.vmem %s13, %s573
        $region72: #{bert_embed.1} parent=23 // pred_fallthru
          _
        // Predicated region
        $region73: #{bert_embed.1} parent=23 // pred_check
          %p575 = pneg %p411
        $region74: #{bert_embed.1} parent=23 // pred_check_branch
          %577 = sbr.rel (%p575) target = $region76
        $region75: #{bert_embed.1} parent=23 // pred_region
          %p578 = scmp.lt.s32.totalorder %s33, 1
          %s579 = scalar_select %p578, %s33, 1
          %s580 = scalar_lea.vmem %s14, %s579
        $region76: #{bert_embed.1} parent=23 // pred_fallthru
          _
        // Predicated region
        $region77: #{bert_embed.1} parent=23 // pred_check
          %p581 = pneg %p437
        $region78: #{bert_embed.1} parent=23 // pred_check_branch
          %583 = sbr.rel (%p581) target = $region80
        $region79: #{bert_embed.1} parent=23 // pred_region
          %p584 = scmp.lt.s32.totalorder %s33, 1
          %s585 = scalar_select %p584, %s33, 1
          %s586 = scalar_lea.vmem %s15, %s585
        $region80: #{bert_embed.1} parent=23 // pred_fallthru
          _
      $region24: #{bert_embed.1} parent=5 // pred_fallthru
        _
      %p587 = scmp.le.s32.totalorder 1, %s25
      %p588 = scmp.lt.s32.totalorder %s25, 5
      %p589 = pnand %p587, %p588
      %p590 = pneg %p589
      // Predicated region
      $region81: #{bert_embed.1} parent=5 // pred_check
        _
      $region82: #{bert_embed.1} parent=5 // pred_check_branch
        %592 = sbr.rel (%p589) target = $region84
      $region83: #{bert_embed.1} parent=5 // pred_region
        %s593 = ssub.s32 %s25, 1
        %p594 = scmp.lt.s32.totalorder %s34, 1
        %s595 = scalar_select %p594, %s34, 1
        %s596 = smul.addr %s595, 4
        %s597 = scalar_lea.vmem %s0, %s596
        %p598 = pneg %p63
        %p599 = pneg %p60
        %p600 = scmp.lt.s32.totalorder %s34, 1
        %s601 = scalar_select %p600, %s34, 1
        %s602 = scalar_lea.vmem %s1, %s601
        %p603 = pneg %p89
        %p604 = pneg %p86
        %p605 = pneg %p110
        %p606 = pneg %p107
        %p607 = pneg %p131
        %p608 = pneg %p128
        %p609 = scmp.lt.s32.totalorder %s35, 1
        %s610 = scalar_select %p609, %s35, 1
        %s611 = smul.addr %s610, 4
        %s612 = smul.addr %s611, 4
        %s613 = scalar_lea.vmem %s4, %s612
        %p614 = pneg %p157
        %p615 = pneg %p154
        %p616 = scmp.lt.s32.totalorder %s35, 1
        %s617 = scalar_select %p616, %s35, 1
        %s618 = scalar_lea.vmem %s5, %s617
        %p619 = pneg %p183
        %p620 = pneg %p180
        %p621 = scmp.lt.s32.totalorder %s35, 1
        %s622 = scalar_select %p621, %s35, 1
        %s623 = smul.addr %s622, 4
        %s624 = smul.addr %s623, 4
        %s625 = scalar_lea.vmem %s6, %s624
        %p626 = pneg %p209
        %p627 = pneg %p206
        %p628 = scmp.lt.s32.totalorder %s35, 1
        %s629 = scalar_select %p628, %s35, 1
        %s630 = scalar_lea.vmem %s7, %s629
        %p631 = pneg %p235
        %p632 = pneg %p232
        %p633 = scmp.lt.s32.totalorder %s35, 1
        %s634 = scalar_select %p633, %s35, 1
        %s635 = scalar_lea.vmem %s8, %s634
        %p636 = pneg %p261
        %p637 = pneg %p258
        %p638 = scmp.lt.s32.totalorder %s35, 1
        %s639 = scalar_select %p638, %s35, 1
        %s640 = scalar_lea.vmem %s9, %s639
        %p641 = pneg %p287
        %p642 = pneg %p284
        %p643 = scmp.lt.s32.totalorder %s35, 1
        %s644 = scalar_select %p643, %s35, 1
        %s645 = smul.addr %s644, 4
        %s646 = smul.addr %s645, 4
        %s647 = scalar_lea.vmem %s10, %s646
        %p648 = pneg %p313
        %p649 = pneg %p310
        %p650 = scmp.lt.s32.totalorder %s35, 1
        %s651 = scalar_select %p650, %s35, 1
        %s652 = scalar_lea.vmem %s11, %s651
        %p653 = pneg %p339
        %p654 = pneg %p336
        %p655 = scmp.lt.s32.totalorder %s35, 1
        %s656 = scalar_select %p655, %s35, 1
        %s657 = smul.addr %s656, 8
        %s658 = smul.addr %s657, 4
        %s659 = scalar_lea.vmem %s12, %s658
        %p660 = pneg %p365
        %p661 = pneg %p362
        %p662 = scmp.lt.s32.totalorder %s35, 1
        %s663 = scalar_select %p662, %s35, 1
        %s664 = scalar_lea.vmem %s13, %s663
        %p665 = pneg %p391
        %p666 = pneg %p388
        %p667 = scmp.lt.s32.totalorder %s35, 1
        %s668 = scalar_select %p667, %s35, 1
        %s669 = scalar_lea.vmem %s14, %s668
        %p670 = pneg %p417
        %p671 = pneg %p414
        %p672 = scmp.lt.s32.totalorder %s35, 1
        %s673 = scalar_select %p672, %s35, 1
        %s674 = scalar_lea.vmem %s15, %s673
        %p675 = pneg %p443
        %p676 = pneg %p440
        %p677 = pneg %p469
        %p678 = pneg %p466
        %s679 = sand.u32 %s456, 1
        %s680 = scalar_lea.sflag [#allocation4], %s679
        %s681 = sand.u32 %s456, 1
        %s682 = smul.addr %s681, 4
        %s683 = scalar_lea.vmem [#allocation3], %s682
        %p684 = scmp.lt.s32.totalorder %s34, 1
        %s685 = scalar_select %p684, %s34, 1
        %s686 = smul.addr %s685, 4
        %s687 = scalar_lea.vmem %s0, %s686
        %p688 = scmp.lt.s32.totalorder %s34, 1
        %s689 = scalar_select %p688, %s34, 1
        %s690 = scalar_lea.vmem %s1, %s689
        %p691 = scmp.lt.s32.totalorder %s35, 1
        %s692 = scalar_select %p691, %s35, 1
        %s693 = smul.addr %s692, 4
        %s694 = smul.addr %s693, 4
        %s695 = scalar_lea.vmem %s4, %s694
        %p696 = scmp.lt.s32.totalorder %s35, 1
        %s697 = scalar_select %p696, %s35, 1
        %s698 = scalar_lea.vmem %s5, %s697
        %p699 = scmp.lt.s32.totalorder %s35, 1
        %s700 = scalar_select %p699, %s35, 1
        %s701 = smul.addr %s700, 4
        %s702 = smul.addr %s701, 4
        %s703 = scalar_lea.vmem %s6, %s702
        %p704 = scmp.lt.s32.totalorder %s35, 1
        %s705 = scalar_select %p704, %s35, 1
        %s706 = scalar_lea.vmem %s7, %s705
        %p707 = scmp.lt.s32.totalorder %s35, 1
        %s708 = scalar_select %p707, %s35, 1
        %s709 = scalar_lea.vmem %s8, %s708
        %p710 = scmp.lt.s32.totalorder %s35, 1
        %s711 = scalar_select %p710, %s35, 1
        %s712 = scalar_lea.vmem %s9, %s711
        %p713 = scmp.lt.s32.totalorder %s35, 1
        %s714 = scalar_select %p713, %s35, 1
        %s715 = smul.addr %s714, 4
        %s716 = smul.addr %s715, 4
        %s717 = scalar_lea.vmem %s10, %s716
        %p718 = scmp.lt.s32.totalorder %s35, 1
        %s719 = scalar_select %p718, %s35, 1
        %s720 = scalar_lea.vmem %s11, %s719
        %p721 = scmp.lt.s32.totalorder %s35, 1
        %s722 = scalar_select %p721, %s35, 1
        %s723 = smul.addr %s722, 8
        %s724 = smul.addr %s723, 4
        %s725 = scalar_lea.vmem %s12, %s724
        %p726 = scmp.lt.s32.totalorder %s35, 1
        %s727 = scalar_select %p726, %s35, 1
        %s728 = scalar_lea.vmem %s13, %s727
        %p729 = scmp.lt.s32.totalorder %s35, 1
        %s730 = scalar_select %p729, %s35, 1
        %s731 = scalar_lea.vmem %s14, %s730
        %p732 = scmp.lt.s32.totalorder %s35, 1
        %s733 = scalar_select %p732, %s35, 1
        %s734 = scalar_lea.vmem %s15, %s733
        %p736 = scmp.eq.s32.totalorder %s35, 0
        // Predicated region
        $region85: #{bert_embed.1} parent=83 // pred_check
          %p737 = pneg %p736
        $region86: #{bert_embed.1} parent=83 // pred_check_branch
          %739 = sbr.rel (%p737) target = $region88
        $region87: #{bert_embed.1} parent=83 // pred_region
          %v740 = vld [vmem:[%s687] sm:$0xf]
          %v741 = vunpack.c.l.bf16 %v740
          %v742 = vld [vmem:[%s2] sm:$0x1]
          %v743 = vld [vmem:[%s3] sm:$0x1]
          %vm744 = vcmask 261120
          %v745 = vsel %vm744, %v741, 0.0
          %746 = vadd.xlane.f32.xlu0 %v745
          %v747 = vpop.xlane.xlu0 %746
          %v748 = vrcp.pop 32.0
          %v749 = vmul.f32 %v747, %v748
          %v750 = vsub.f32 %v741, %v749
          %v751 = vmul.f32 %v750, %v750
          %v752 = vsel %vm744, %v751, 0.0
          %753 = vadd.xlane.f32.xlu0 %v752
          %v754 = vpop.xlane.xlu0 %753
          %v755 = vmul.f32 %v754, %v748
          %v756 = vadd.f32 %v755, 1e-12
          %v757 = vrsqrt.pop %v756
          %v758 = vmul.f32 %v750, %v757
          %v760 = vlaneseq
          %v761 = vshrl.u32 %v760, 7
          %v762 = vsub.s32 0, %v761
          %v763 = vrot.slane %v742, %v762
          %v765 = vmul.f32 %v758, %v763
          %v767 = vlaneseq
          %v768 = vshrl.u32 %v767, 7
          %v769 = vsub.s32 0, %v768
          %v770 = vrot.slane %v743, %v769
          %v772 = vadd.f32 %v765, %v770
          %773 = vst.msk [vmem:[#allocation2] sm:$0xff] %vm744, %v772
        $region88: #{bert_embed.1} parent=83 // pred_fallthru
          _
        %v774 = vld [vmem:[#allocation2] sm:$0xff]
        %v775 = vld [vmem:[%s690] sm:$0x1]
        %v776 = vld [vmem:[%s695] sm:$0xf]
        %v777 = vld [vmem:[%s695 + $0x4] sm:$0xf]
        %v778 = vld [vmem:[%s695 + $0x8] sm:$0xf]
        %v779 = vld [vmem:[%s695 + $0xc] sm:$0xf]
        %v780 = vpack.c.bf16 %v774, %v774
        %v781 = vld [vmem:[%s698] sm:$0x1]
        %v783 = vlaneseq
        %v784 = vshrl.u32 %v783, 7
        %v785 = vsub.s32 0, %v784
        %v786 = vrot.slane %v781, %v785
        %v792 = vunpack.c.l.b16 %v776
        %v793 = vunpack.c.l.b16 %v777
        %v794 = vunpack.c.l.b16 %v778
        %v795 = vunpack.c.l.b16 %v779
        %v796 = vpack.c.b16 %v793, %v792
        %v797 = vpack.c.b16 %v795, %v794
        %vm800 = vcmask 261120
        %v802 = vsel %vm800, %v780, 0
        %804 = vmatprep.subr.bf16.mxu0 0
        %805 = vmatpush1.bf16.msra.mxu0 0
        %806 = vmatprep.subr.bf16.mxu0 0
        %807 = vmatpush1.bf16.msra.mxu0 0
        %808 = vmatprep.subr.bf16.mxu0 0
        %809 = vmatpush1.bf16.msra.mxu0 0
        %810 = vmatprep.subr.bf16.mxu0 0
        %811 = vmatpush1.bf16.msra.mxu0 0
        %812 = vmatprep.subr.bf16.mxu0 0
        %813 = vmatpush1.bf16.msra.mxu0 0
        %814 = vmatprep.subr.bf16.mxu0 0
        %815 = vmatpush1.bf16.msra.mxu0 0
        %816 = vmatprep.subr.bf16.mxu0 0
        %817 = vmatpush1.bf16.msra.mxu0 %v797
        %818 = vmatprep.subr.bf16.mxu0 0
        %819 = vmatpush1.bf16.msra.mxu0 %v796
        %820 = vmatprep.subr.bf16.mxu0 0
        %821 = vmatpush2.bf16.msra.mxu0 0
        %822 = vmatprep.subr.bf16.mxu0 0
        %823 = vmatpush2.bf16.msra.mxu0 0
        %824 = vmatprep.subr.bf16.mxu0 0
        %825 = vmatpush2.bf16.msra.mxu0 0
        %826 = vmatprep.subr.bf16.mxu0 0
        %827 = vmatpush2.bf16.msra.mxu0 0
        %828 = vmatprep.subr.bf16.mxu0 0
        %829 = vmatpush2.bf16.msra.mxu0 0
        %830 = vmatprep.subr.bf16.mxu0 0
        %831 = vmatpush2.bf16.msra.mxu0 0
        %832 = vmatprep.subr.bf16.mxu0 0
        %833 = vmatpush2.bf16.msra.mxu0 0
        %834 = vmatprep.subr.bf16.mxu0 0
        %835 = vmatpush2.bf16.msra.mxu0 0
        %836 = vmatprep.mubr.bf16.mxu0 0
        %837 = vmatmul.mubr.bf16.gmra.mxu0 %v802
        %v838 = vpop.f32.mrf.mxu0
        %v839 = vadd.f32 %v786, %v838
        %v840 = vpop.f32.mrf.mxu0
        %v841 = vpop.f32.mrf.mxu0
        %v842 = vpop.f32.mrf.mxu0
        %843 = vdwg.mxu0
        %845 = vrot.lane.b32.xlu0 %v839, 120
        %v846 = vpop.permute.xlu0 %845
        %848 = vrot.lane.b32.xlu0 %v839, 112
        %v849 = vpop.permute.xlu0 %848
        %851 = vrot.lane.b32.xlu0 %v839, 104
        %v852 = vpop.permute.xlu0 %851
        %854 = vrot.lane.b32.xlu0 %v839, 96
        %v855 = vpop.permute.xlu0 %854
        %857 = vrot.lane.b32.xlu0 %v839, 88
        %v858 = vpop.permute.xlu0 %857
        %860 = vrot.lane.b32.xlu0 %v839, 80
        %v861 = vpop.permute.xlu0 %860
        %863 = vrot.lane.b32.xlu0 %v839, 72
        %v864 = vpop.permute.xlu0 %863
        %866 = vrot.lane.b32.xlu0 %v839, 64
        %v867 = vpop.permute.xlu0 %866
        %869 = vrot.lane.b32.xlu0 %v839, 56
        %v870 = vpop.permute.xlu0 %869
        %872 = vrot.lane.b32.xlu0 %v839, 48
        %v873 = vpop.permute.xlu0 %872
        %875 = vrot.lane.b32.xlu0 %v839, 40
        %v876 = vpop.permute.xlu0 %875
        %v878 = vcombine.low %v839, %v849
        %v879 = vcombine.high %v839, %v849
        %v881 = vunpack.c.l.s4 1983009808
        %v882 = vunpack.c.0.s8 %v881
        %v883 = vlaneseq
        %v884 = vshrl.u32 %v883, 7
        %v885 = vsub.s32 %v882, %v884
        %v886 = vrot.slane %v878, %v885
        %v888 = vunpack.c.l.s4 1983009808
        %v889 = vunpack.c.0.s8 %v888
        %v890 = vlaneseq
        %v891 = vshrl.u32 %v890, 7
        %v892 = vsub.s32 %v889, %v891
        %v893 = vrot.slane %v879, %v892
        %v894 = vcombine.low %v846, %v852
        %v895 = vcombine.high %v846, %v852
        %v897 = vunpack.c.l.s4 1983009808
        %v898 = vunpack.c.0.s8 %v897
        %v899 = vlaneseq
        %v900 = vshrl.u32 %v899, 7
        %v901 = vsub.s32 %v898, %v900
        %v902 = vrot.slane %v894, %v901
        %v904 = vunpack.c.l.s4 1983009808
        %v905 = vunpack.c.0.s8 %v904
        %v906 = vlaneseq
        %v907 = vshrl.u32 %v906, 7
        %v908 = vsub.s32 %v905, %v907
        %v909 = vrot.slane %v895, %v908
        %v910 = vcombine.low %v855, %v861
        %v911 = vcombine.high %v855, %v861
        %v913 = vunpack.c.l.s4 1983009808
        %v914 = vunpack.c.0.s8 %v913
        %v915 = vlaneseq
        %v916 = vshrl.u32 %v915, 7
        %v917 = vsub.s32 %v914, %v916
        %v918 = vrot.slane %v910, %v917
        %v920 = vunpack.c.l.s4 1983009808
        %v921 = vunpack.c.0.s8 %v920
        %v922 = vlaneseq
        %v923 = vshrl.u32 %v922, 7
        %v924 = vsub.s32 %v921, %v923
        %v925 = vrot.slane %v911, %v924
        %v926 = vcombine.low %v858, %v864
        %v927 = vcombine.high %v858, %v864
        %v929 = vunpack.c.l.s4 1983009808
        %v930 = vunpack.c.0.s8 %v929
        %v931 = vlaneseq
        %v932 = vshrl.u32 %v931, 7
        %v933 = vsub.s32 %v930, %v932
        %v934 = vrot.slane %v926, %v933
        %v936 = vunpack.c.l.s4 1983009808
        %v937 = vunpack.c.0.s8 %v936
        %v938 = vlaneseq
        %v939 = vshrl.u32 %v938, 7
        %v940 = vsub.s32 %v937, %v939
        %v941 = vrot.slane %v927, %v940
        %v942 = vcombine.low %v886, %v902
        %v943 = vcombine.high %v886, %v902
        %v945 = vunpack.c.l.s4 1934713408
        %v946 = vunpack.c.0.s8 %v945
        %v947 = vlaneseq
        %v948 = vshrl.u32 %v947, 7
        %v949 = vsub.s32 %v946, %v948
        %v950 = vrot.slane %v942, %v949
        %v952 = vunpack.c.l.s4 1934713408
        %v953 = vunpack.c.0.s8 %v952
        %v954 = vlaneseq
        %v955 = vshrl.u32 %v954, 7
        %v956 = vsub.s32 %v953, %v955
        %v957 = vrot.slane %v943, %v956
        %v958 = vcombine.low %v893, %v909
        %v959 = vcombine.high %v893, %v909
        %v961 = vunpack.c.l.s4 1934713408
        %v962 = vunpack.c.0.s8 %v961
        %v963 = vlaneseq
        %v964 = vshrl.u32 %v963, 7
        %v965 = vsub.s32 %v962, %v964
        %v966 = vrot.slane %v958, %v965
        %v968 = vunpack.c.l.s4 1934713408
        %v969 = vunpack.c.0.s8 %v968
        %v970 = vlaneseq
        %v971 = vshrl.u32 %v970, 7
        %v972 = vsub.s32 %v969, %v971
        %v973 = vrot.slane %v959, %v972
        %v974 = vcombine.low %v918, %v934
        %v975 = vcombine.high %v918, %v934
        %v977 = vunpack.c.l.s4 1934713408
        %v978 = vunpack.c.0.s8 %v977
        %v979 = vlaneseq
        %v980 = vshrl.u32 %v979, 7
        %v981 = vsub.s32 %v978, %v980
        %v982 = vrot.slane %v974, %v981
        %v984 = vunpack.c.l.s4 1934713408
        %v985 = vunpack.c.0.s8 %v984
        %v986 = vlaneseq
        %v987 = vshrl.u32 %v986, 7
        %v988 = vsub.s32 %v985, %v987
        %v989 = vrot.slane %v975, %v988
        %v990 = vcombine.low %v925, %v941
        %v991 = vcombine.high %v925, %v941
        %v993 = vunpack.c.l.s4 1934713408
        %v994 = vunpack.c.0.s8 %v993
        %v995 = vlaneseq
        %v996 = vshrl.u32 %v995, 7
        %v997 = vsub.s32 %v994, %v996
        %v998 = vrot.slane %v990, %v997
        %v1000 = vunpack.c.l.s4 1934713408
        %v1001 = vunpack.c.0.s8 %v1000
        %v1002 = vlaneseq
        %v1003 = vshrl.u32 %v1002, 7
        %v1004 = vsub.s32 %v1001, %v1003
        %v1005 = vrot.slane %v991, %v1004
        %v1006 = vcombine.low %v950, %v982
        %v1007 = vcombine.high %v950, %v982
        %v1008 = vcombine.low %v957, %v989
        %v1009 = vcombine.high %v957, %v989
        %v1010 = vcombine.low %v966, %v998
        %v1011 = vcombine.high %v966, %v998
        %v1012 = vcombine.low %v973, %v1005
        %v1013 = vcombine.high %v973, %v1005
        %v1014 = vcombine.low %v867, %v873
        %v1015 = vcombine.high %v867, %v873
        %v1017 = vunpack.c.l.s4 1983009808
        %v1018 = vunpack.c.0.s8 %v1017
        %v1019 = vlaneseq
        %v1020 = vshrl.u32 %v1019, 7
        %v1021 = vsub.s32 %v1018, %v1020
        %v1022 = vrot.slane %v1014, %v1021
        %v1024 = vunpack.c.l.s4 1983009808
        %v1025 = vunpack.c.0.s8 %v1024
        %v1026 = vlaneseq
        %v1027 = vshrl.u32 %v1026, 7
        %v1028 = vsub.s32 %v1025, %v1027
        %v1029 = vrot.slane %v1015, %v1028
        %v1030 = vcombine.low %v870, %v876
        %v1031 = vcombine.high %v870, %v876
        %v1033 = vunpack.c.l.s4 1983009808
        %v1034 = vunpack.c.0.s8 %v1033
        %v1035 = vlaneseq
        %v1036 = vshrl.u32 %v1035, 7
        %v1037 = vsub.s32 %v1034, %v1036
        %v1038 = vrot.slane %v1030, %v1037
        %v1040 = vunpack.c.l.s4 1983009808
        %v1041 = vunpack.c.0.s8 %v1040
        %v1042 = vlaneseq
        %v1043 = vshrl.u32 %v1042, 7
        %v1044 = vsub.s32 %v1041, %v1043
        %v1045 = vrot.slane %v1031, %v1044
        %v1046 = vcombine.low %v1022, %v1038
        %v1047 = vcombine.high %v1022, %v1038
        %v1049 = vunpack.c.l.s4 1934713408
        %v1050 = vunpack.c.0.s8 %v1049
        %v1051 = vlaneseq
        %v1052 = vshrl.u32 %v1051, 7
        %v1053 = vsub.s32 %v1050, %v1052
        %v1054 = vrot.slane %v1046, %v1053
        %v1056 = vunpack.c.l.s4 1934713408
        %v1057 = vunpack.c.0.s8 %v1056
        %v1058 = vlaneseq
        %v1059 = vshrl.u32 %v1058, 7
        %v1060 = vsub.s32 %v1057, %v1059
        %v1061 = vrot.slane %v1047, %v1060
        %v1062 = vcombine.low %v1029, %v1045
        %v1063 = vcombine.high %v1029, %v1045
        %v1065 = vunpack.c.l.s4 1934713408
        %v1066 = vunpack.c.0.s8 %v1065
        %v1067 = vlaneseq
        %v1068 = vshrl.u32 %v1067, 7
        %v1069 = vsub.s32 %v1066, %v1068
        %v1070 = vrot.slane %v1062, %v1069
        %v1072 = vunpack.c.l.s4 1934713408
        %v1073 = vunpack.c.0.s8 %v1072
        %v1074 = vlaneseq
        %v1075 = vshrl.u32 %v1074, 7
        %v1076 = vsub.s32 %v1073, %v1075
        %v1077 = vrot.slane %v1063, %v1076
        %v1078 = vcombine.high %v1054, 0.0
        %v1079 = vcombine.high %v1061, 0.0
        %v1080 = vcombine.high %v1070, 0.0
        %v1081 = vcombine.high %v1077, 0.0
        %v1082 = vcombine.low %v1006, %v1008
        %v1083 = vcombine.high %v1006, %v1008
        %v1085 = vunpack.c.l.s4 1983009808
        %v1086 = vunpack.c.0.s8 %v1085
        %v1087 = vlaneseq
        %v1088 = vshrl.u32 %v1087, 7
        %v1089 = vsub.s32 %v1086, %v1088
        %v1090 = vrot.slane %v1082, %v1089
        %v1092 = vunpack.c.l.s4 1983009808
        %v1093 = vunpack.c.0.s8 %v1092
        %v1094 = vlaneseq
        %v1095 = vshrl.u32 %v1094, 7
        %v1096 = vsub.s32 %v1093, %v1095
        %v1097 = vrot.slane %v1083, %v1096
        %v1098 = vcombine.low %v1007, %v1009
        %v1099 = vcombine.high %v1007, %v1009
        %v1101 = vunpack.c.l.s4 1983009808
        %v1102 = vunpack.c.0.s8 %v1101
        %v1103 = vlaneseq
        %v1104 = vshrl.u32 %v1103, 7
        %v1105 = vsub.s32 %v1102, %v1104
        %v1106 = vrot.slane %v1098, %v1105
        %v1108 = vunpack.c.l.s4 1983009808
        %v1109 = vunpack.c.0.s8 %v1108
        %v1110 = vlaneseq
        %v1111 = vshrl.u32 %v1110, 7
        %v1112 = vsub.s32 %v1109, %v1111
        %v1113 = vrot.slane %v1099, %v1112
        %v1114 = vcombine.low %v1010, %v1012
        %v1115 = vcombine.high %v1010, %v1012
        %v1117 = vunpack.c.l.s4 1983009808
        %v1118 = vunpack.c.0.s8 %v1117
        %v1119 = vlaneseq
        %v1120 = vshrl.u32 %v1119, 7
        %v1121 = vsub.s32 %v1118, %v1120
        %v1122 = vrot.slane %v1114, %v1121
        %v1124 = vunpack.c.l.s4 1983009808
        %v1125 = vunpack.c.0.s8 %v1124
        %v1126 = vlaneseq
        %v1127 = vshrl.u32 %v1126, 7
        %v1128 = vsub.s32 %v1125, %v1127
        %v1129 = vrot.slane %v1115, %v1128
        %v1130 = vcombine.low %v1011, %v1013
        %v1131 = vcombine.high %v1011, %v1013
        %v1133 = vunpack.c.l.s4 1983009808
        %v1134 = vunpack.c.0.s8 %v1133
        %v1135 = vlaneseq
        %v1136 = vshrl.u32 %v1135, 7
        %v1137 = vsub.s32 %v1134, %v1136
        %v1138 = vrot.slane %v1130, %v1137
        %v1140 = vunpack.c.l.s4 1983009808
        %v1141 = vunpack.c.0.s8 %v1140
        %v1142 = vlaneseq
        %v1143 = vshrl.u32 %v1142, 7
        %v1144 = vsub.s32 %v1141, %v1143
        %v1145 = vrot.slane %v1131, %v1144
        %v1146 = vcombine.low %v1090, %v1106
        %v1147 = vcombine.high %v1090, %v1106
        %v1149 = vunpack.c.l.s4 1934713408
        %v1150 = vunpack.c.0.s8 %v1149
        %v1151 = vlaneseq
        %v1152 = vshrl.u32 %v1151, 7
        %v1153 = vsub.s32 %v1150, %v1152
        %v1154 = vrot.slane %v1146, %v1153
        %v1156 = vunpack.c.l.s4 1934713408
        %v1157 = vunpack.c.0.s8 %v1156
        %v1158 = vlaneseq
        %v1159 = vshrl.u32 %v1158, 7
        %v1160 = vsub.s32 %v1157, %v1159
        %v1161 = vrot.slane %v1147, %v1160
        %v1162 = vcombine.low %v1097, %v1113
        %v1163 = vcombine.high %v1097, %v1113
        %v1165 = vunpack.c.l.s4 1934713408
        %v1166 = vunpack.c.0.s8 %v1165
        %v1167 = vlaneseq
        %v1168 = vshrl.u32 %v1167, 7
        %v1169 = vsub.s32 %v1166, %v1168
        %v1170 = vrot.slane %v1162, %v1169
        %v1172 = vunpack.c.l.s4 1934713408
        %v1173 = vunpack.c.0.s8 %v1172
        %v1174 = vlaneseq
        %v1175 = vshrl.u32 %v1174, 7
        %v1176 = vsub.s32 %v1173, %v1175
        %v1177 = vrot.slane %v1163, %v1176
        %v1178 = vcombine.low %v1122, %v1138
        %v1179 = vcombine.high %v1122, %v1138
        %v1181 = vunpack.c.l.s4 1934713408
        %v1182 = vunpack.c.0.s8 %v1181
        %v1183 = vlaneseq
        %v1184 = vshrl.u32 %v1183, 7
        %v1185 = vsub.s32 %v1182, %v1184
        %v1186 = vrot.slane %v1178, %v1185
        %v1188 = vunpack.c.l.s4 1934713408
        %v1189 = vunpack.c.0.s8 %v1188
        %v1190 = vlaneseq
        %v1191 = vshrl.u32 %v1190, 7
        %v1192 = vsub.s32 %v1189, %v1191
        %v1193 = vrot.slane %v1179, %v1192
        %v1194 = vcombine.low %v1129, %v1145
        %v1195 = vcombine.high %v1129, %v1145
        %v1197 = vunpack.c.l.s4 1934713408
        %v1198 = vunpack.c.0.s8 %v1197
        %v1199 = vlaneseq
        %v1200 = vshrl.u32 %v1199, 7
        %v1201 = vsub.s32 %v1198, %v1200
        %v1202 = vrot.slane %v1194, %v1201
        %v1204 = vunpack.c.l.s4 1934713408
        %v1205 = vunpack.c.0.s8 %v1204
        %v1206 = vlaneseq
        %v1207 = vshrl.u32 %v1206, 7
        %v1208 = vsub.s32 %v1205, %v1207
        %v1209 = vrot.slane %v1195, %v1208
        %v1210 = vcombine.low %v1154, %v1186
        %v1211 = vcombine.high %v1154, %v1186
        %v1212 = vcombine.low %v1161, %v1193
        %v1213 = vcombine.high %v1161, %v1193
        %v1214 = vcombine.low %v1170, %v1202
        %v1215 = vcombine.high %v1170, %v1202
        %v1216 = vcombine.low %v1177, %v1209
        %v1217 = vcombine.high %v1177, %v1209
        %v1218 = vcombine.low %v1054, %v1061
        %v1220 = vunpack.c.l.s4 1983009808
        %v1221 = vunpack.c.0.s8 %v1220
        %v1222 = vlaneseq
        %v1223 = vshrl.u32 %v1222, 7
        %v1224 = vsub.s32 %v1221, %v1223
        %v1225 = vrot.slane %v1218, %v1224
        %v1226 = vcombine.low %v1078, %v1079
        %v1228 = vunpack.c.l.s4 1983009808
        %v1229 = vunpack.c.0.s8 %v1228
        %v1230 = vlaneseq
        %v1231 = vshrl.u32 %v1230, 7
        %v1232 = vsub.s32 %v1229, %v1231
        %v1233 = vrot.slane %v1226, %v1232
        %v1234 = vcombine.low %v1070, %v1077
        %v1236 = vunpack.c.l.s4 1983009808
        %v1237 = vunpack.c.0.s8 %v1236
        %v1238 = vlaneseq
        %v1239 = vshrl.u32 %v1238, 7
        %v1240 = vsub.s32 %v1237, %v1239
        %v1241 = vrot.slane %v1234, %v1240
        %v1242 = vcombine.low %v1080, %v1081
        %v1244 = vunpack.c.l.s4 1983009808
        %v1245 = vunpack.c.0.s8 %v1244
        %v1246 = vlaneseq
        %v1247 = vshrl.u32 %v1246, 7
        %v1248 = vsub.s32 %v1245, %v1247
        %v1249 = vrot.slane %v1242, %v1248
        %v1250 = vcombine.low %v1225, %v1233
        %v1251 = vcombine.high %v1225, %v1233
        %v1253 = vunpack.c.l.s4 1934713408
        %v1254 = vunpack.c.0.s8 %v1253
        %v1255 = vlaneseq
        %v1256 = vshrl.u32 %v1255, 7
        %v1257 = vsub.s32 %v1254, %v1256
        %v1258 = vrot.slane %v1250, %v1257
        %v1260 = vunpack.c.l.s4 1934713408
        %v1261 = vunpack.c.0.s8 %v1260
        %v1262 = vlaneseq
        %v1263 = vshrl.u32 %v1262, 7
        %v1264 = vsub.s32 %v1261, %v1263
        %v1265 = vrot.slane %v1251, %v1264
        %v1266 = vcombine.low %v1241, %v1249
        %v1267 = vcombine.high %v1241, %v1249
        %v1269 = vunpack.c.l.s4 1934713408
        %v1270 = vunpack.c.0.s8 %v1269
        %v1271 = vlaneseq
        %v1272 = vshrl.u32 %v1271, 7
        %v1273 = vsub.s32 %v1270, %v1272
        %v1274 = vrot.slane %v1266, %v1273
        %v1276 = vunpack.c.l.s4 1934713408
        %v1277 = vunpack.c.0.s8 %v1276
        %v1278 = vlaneseq
        %v1279 = vshrl.u32 %v1278, 7
        %v1280 = vsub.s32 %v1277, %v1279
        %v1281 = vrot.slane %v1267, %v1280
        %v1282 = vcombine.low %v1258, %v1274
        %v1283 = vcombine.high %v1258, %v1274
        %v1284 = vcombine.low %v1265, %v1281
        %v1285 = vcombine.high %v1265, %v1281
        %v1286 = vpack.c.bf16 %v1210, %v1210
        %v1287 = vpack.c.bf16 %v1211, %v1211
        %v1288 = vpack.c.bf16 %v1212, %v1212
        %v1289 = vpack.c.bf16 %v1213, %v1213
        %v1290 = vpack.c.bf16 %v1214, %v1214
        %v1291 = vpack.c.bf16 %v1215, %v1215
        %v1292 = vpack.c.bf16 %v1216, %v1216
        %v1293 = vpack.c.bf16 %v1217, %v1217
        %v1294 = vpack.c.bf16 %v1282, %v1282
        %v1295 = vpack.c.bf16 %v1283, %v1283
        %v1296 = vpack.c.bf16 %v1284, %v1284
        %v1297 = vpack.c.bf16 %v1285, %v1285
        %v1299 = vlaneseq
        %v1300 = vshrl.u32 %v1299, 7
        %v1301 = vsub.s32 0, %v1300
        %v1302 = vrot.slane %v775, %v1301
        %vm1304 = vcmask 64512
        %v1306 = vsel %vm1304, %v1286, 0
        %v1309 = vsel %vm1304, %v1290, 0
        %1311 = vmatprep.subr.bf16.mxu0 0
        %1312 = vmatpush1.bf16.xpose.msra.mxu0 0
        %1313 = vmatprep.subr.bf16.mxu0 0
        %1314 = vmatpush1.bf16.xpose.msra.mxu0 0
        %1315 = vmatprep.subr.bf16.mxu0 0
        %1316 = vmatpush1.bf16.xpose.msra.mxu0 0
        %1317 = vmatprep.subr.bf16.mxu0 0
        %1318 = vmatpush1.bf16.xpose.msra.mxu0 0
        %1319 = vmatprep.subr.bf16.mxu0 0
        %1320 = vmatpush1.bf16.xpose.msra.mxu0 0
        %1321 = vmatprep.subr.bf16.mxu0 0
        %1322 = vmatpush1.bf16.xpose.msra.mxu0 0
        %1323 = vmatprep.subr.bf16.mxu0 0
        %1324 = vmatpush1.bf16.xpose.msra.mxu0 0
        %1325 = vmatprep.subr.bf16.mxu0 0
        %1326 = vmatpush1.bf16.xpose.msra.mxu0 %v1309
        %1327 = vmatprep.subr.bf16.mxu0 0
        %1328 = vmatpush2.bf16.xpose.msra.mxu0 0
        %1329 = vmatprep.subr.bf16.mxu0 0
        %1330 = vmatpush2.bf16.xpose.msra.mxu0 0
        %1331 = vmatprep.subr.bf16.mxu0 0
        %1332 = vmatpush2.bf16.xpose.msra.mxu0 0
        %1333 = vmatprep.subr.bf16.mxu0 0
        %1334 = vmatpush2.bf16.xpose.msra.mxu0 0
        %1335 = vmatprep.subr.bf16.mxu0 0
        %1336 = vmatpush2.bf16.xpose.msra.mxu0 0
        %1337 = vmatprep.subr.bf16.mxu0 0
        %1338 = vmatpush2.bf16.xpose.msra.mxu0 0
        %1339 = vmatprep.subr.bf16.mxu0 0
        %1340 = vmatpush2.bf16.xpose.msra.mxu0 0
        %1341 = vmatprep.subr.bf16.mxu0 0
        %1342 = vmatpush2.bf16.xpose.msra.mxu0 0
        %1343 = vmatprep.mubr.bf16.mxu0 0
        %1344 = vmatmul.mubr.bf16.gmra.mxu0 %v1306
        %v1345 = vpop.f32.mrf.mxu0
        %v1346 = vadd.f32 %v1302, %v1345
        %v1347 = vpop.f32.mrf.mxu0
        %v1348 = vpop.f32.mrf.mxu0
        %v1349 = vpop.f32.mrf.mxu0
        %1350 = vdwg.mxu0
        %v1352 = vsel %vm1304, %v1287, 0
        %v1355 = vsel %vm1304, %v1291, 0
        %1357 = vmatprep.subr.bf16.mxu0 0
        %1358 = vmatpush1.bf16.xpose.msra.mxu0 0
        %1359 = vmatprep.subr.bf16.mxu0 0
        %1360 = vmatpush1.bf16.xpose.msra.mxu0 0
        %1361 = vmatprep.subr.bf16.mxu0 0
        %1362 = vmatpush1.bf16.xpose.msra.mxu0 0
        %1363 = vmatprep.subr.bf16.mxu0 0
        %1364 = vmatpush1.bf16.xpose.msra.mxu0 0
        %1365 = vmatprep.subr.bf16.mxu0 0
        %1366 = vmatpush1.bf16.xpose.msra.mxu0 0
        %1367 = vmatprep.subr.bf16.mxu0 0
        %1368 = vmatpush1.bf16.xpose.msra.mxu0 0
        %1369 = vmatprep.subr.bf16.mxu0 0
        %1370 = vmatpush1.bf16.xpose.msra.mxu0 0
        %1371 = vmatprep.subr.bf16.mxu0 0
        %1372 = vmatpush1.bf16.xpose.msra.mxu0 %v1355
        %1373 = vmatprep.subr.bf16.mxu0 0
        %1374 = vmatpush2.bf16.xpose.msra.mxu0 0
        %1375 = vmatprep.subr.bf16.mxu0 0
        %1376 = vmatpush2.bf16.xpose.msra.mxu0 0
        %1377 = vmatprep.subr.bf16.mxu0 0
        %1378 = vmatpush2.bf16.xpose.msra.mxu0 0
        %1379 = vmatprep.subr.bf16.mxu0 0
        %1380 = vmatpush2.bf16.xpose.msra.mxu0 0
        %1381 = vmatprep.subr.bf16.mxu0 0
        %1382 = vmatpush2.bf16.xpose.msra.mxu0 0
        %1383 = vmatprep.subr.bf16.mxu0 0
        %1384 = vmatpush2.bf16.xpose.msra.mxu0 0
        %1385 = vmatprep.subr.bf16.mxu0 0
        %1386 = vmatpush2.bf16.xpose.msra.mxu0 0
        %1387 = vmatprep.subr.bf16.mxu0 0
        %1388 = vmatpush2.bf16.xpose.msra.mxu0 0
        %1389 = vmatprep.mubr.bf16.mxu0 0
        %1390 = vmatmul.mubr.bf16.gmra.mxu0 %v1352
        %v1391 = vpop.f32.mrf.mxu0
        %v1392 = vadd.f32 %v1302, %v1391
        %v1393 = vpop.f32.mrf.mxu0
        %v1394 = vpop.f32.mrf.mxu0
        %v1395 = vpop.f32.mrf.mxu0
        %1396 = vdwg.mxu0
        %v1398 = vsel %vm1304, %v1288, 0
        %v1401 = vsel %vm1304, %v1292, 0
        %1403 = vmatprep.subr.bf16.mxu0 0
        %1404 = vmatpush1.bf16.xpose.msra.mxu0 0
        %1405 = vmatprep.subr.bf16.mxu0 0
        %1406 = vmatpush1.bf16.xpose.msra.mxu0 0
        %1407 = vmatprep.subr.bf16.mxu0 0
        %1408 = vmatpush1.bf16.xpose.msra.mxu0 0
        %1409 = vmatprep.subr.bf16.mxu0 0
        %1410 = vmatpush1.bf16.xpose.msra.mxu0 0
        %1411 = vmatprep.subr.bf16.mxu0 0
        %1412 = vmatpush1.bf16.xpose.msra.mxu0 0
        %1413 = vmatprep.subr.bf16.mxu0 0
        %1414 = vmatpush1.bf16.xpose.msra.mxu0 0
        %1415 = vmatprep.subr.bf16.mxu0 0
        %1416 = vmatpush1.bf16.xpose.msra.mxu0 0
        %1417 = vmatprep.subr.bf16.mxu0 0
        %1418 = vmatpush1.bf16.xpose.msra.mxu0 %v1401
        %1419 = vmatprep.subr.bf16.mxu0 0
        %1420 = vmatpush2.bf16.xpose.msra.mxu0 0
        %1421 = vmatprep.subr.bf16.mxu0 0
        %1422 = vmatpush2.bf16.xpose.msra.mxu0 0
        %1423 = vmatprep.subr.bf16.mxu0 0
        %1424 = vmatpush2.bf16.xpose.msra.mxu0 0
        %1425 = vmatprep.subr.bf16.mxu0 0
        %1426 = vmatpush2.bf16.xpose.msra.mxu0 0
        %1427 = vmatprep.subr.bf16.mxu0 0
        %1428 = vmatpush2.bf16.xpose.msra.mxu0 0
        %1429 = vmatprep.subr.bf16.mxu0 0
        %1430 = vmatpush2.bf16.xpose.msra.mxu0 0
        %1431 = vmatprep.subr.bf16.mxu0 0
        %1432 = vmatpush2.bf16.xpose.msra.mxu0 0
        %1433 = vmatprep.subr.bf16.mxu0 0
        %1434 = vmatpush2.bf16.xpose.msra.mxu0 0
        %1435 = vmatprep.mubr.bf16.mxu0 0
        %1436 = vmatmul.mubr.bf16.gmra.mxu0 %v1398
        %v1437 = vpop.f32.mrf.mxu0
        %v1438 = vadd.f32 %v1302, %v1437
        %v1439 = vpop.f32.mrf.mxu0
        %v1440 = vpop.f32.mrf.mxu0
        %v1441 = vpop.f32.mrf.mxu0
        %1442 = vdwg.mxu0
        %v1444 = vsel %vm1304, %v1289, 0
        %v1447 = vsel %vm1304, %v1293, 0
        %1449 = vmatprep.subr.bf16.mxu0 0
        %1450 = vmatpush1.bf16.xpose.msra.mxu0 0
        %1451 = vmatprep.subr.bf16.mxu0 0
        %1452 = vmatpush1.bf16.xpose.msra.mxu0 0
        %1453 = vmatprep.subr.bf16.mxu0 0
        %1454 = vmatpush1.bf16.xpose.msra.mxu0 0
        %1455 = vmatprep.subr.bf16.mxu0 0
        %1456 = vmatpush1.bf16.xpose.msra.mxu0 0
        %1457 = vmatprep.subr.bf16.mxu0 0
        %1458 = vmatpush1.bf16.xpose.msra.mxu0 0
        %1459 = vmatprep.subr.bf16.mxu0 0
        %1460 = vmatpush1.bf16.xpose.msra.mxu0 0
        %1461 = vmatprep.subr.bf16.mxu0 0
        %1462 = vmatpush1.bf16.xpose.msra.mxu0 0
        %1463 = vmatprep.subr.bf16.mxu0 0
        %1464 = vmatpush1.bf16.xpose.msra.mxu0 %v1447
        %1465 = vmatprep.subr.bf16.mxu0 0
        %1466 = vmatpush2.bf16.xpose.msra.mxu0 0
        %1467 = vmatprep.subr.bf16.mxu0 0
        %1468 = vmatpush2.bf16.xpose.msra.mxu0 0
        %1469 = vmatprep.subr.bf16.mxu0 0
        %1470 = vmatpush2.bf16.xpose.msra.mxu0 0
        %1471 = vmatprep.subr.bf16.mxu0 0
        %1472 = vmatpush2.bf16.xpose.msra.mxu0 0
        %1473 = vmatprep.subr.bf16.mxu0 0
        %1474 = vmatpush2.bf16.xpose.msra.mxu0 0
        %1475 = vmatprep.subr.bf16.mxu0 0
        %1476 = vmatpush2.bf16.xpose.msra.mxu0 0
        %1477 = vmatprep.subr.bf16.mxu0 0
        %1478 = vmatpush2.bf16.xpose.msra.mxu0 0
        %1479 = vmatprep.subr.bf16.mxu0 0
        %1480 = vmatpush2.bf16.xpose.msra.mxu0 0
        %1481 = vmatprep.mubr.bf16.mxu0 0
        %1482 = vmatmul.mubr.bf16.gmra.mxu0 %v1444
        %v1483 = vpop.f32.mrf.mxu0
        %v1484 = vadd.f32 %v1302, %v1483
        %v1485 = vpop.f32.mrf.mxu0
        %v1486 = vpop.f32.mrf.mxu0
        %v1487 = vpop.f32.mrf.mxu0
        %1488 = vdwg.mxu0
        %v1489 = vsel %vm1304, %v1346, -inf
        %1490 = vmax.xlane.f32.xlu0 %v1489
        %v1491 = vpop.xlane.xlu0 %1490
        %v1492 = vsel %vm1304, %v1392, -inf
        %1493 = vmax.xlane.f32.xlu0 %v1492
        %v1494 = vpop.xlane.xlu0 %1493
        %v1495 = vsel %vm1304, %v1438, -inf
        %1496 = vmax.xlane.f32.xlu0 %v1495
        %v1497 = vpop.xlane.xlu0 %1496
        %v1498 = vsel %vm1304, %v1484, -inf
        %1499 = vmax.xlane.f32.xlu0 %v1498
        %v1500 = vpop.xlane.xlu0 %1499
        %v1501 = vsub.f32 %v1346, %v1491
        %v1502 = vsub.f32 %v1392, %v1494
        %v1503 = vsub.f32 %v1438, %v1497
        %v1504 = vsub.f32 %v1484, %v1500
        %v1505 = vmul.f32 %v1501, 1.442695
        %v1506 = vpow.pop %v1505
        %v1507 = vmul.f32 %v1502, 1.442695
        %v1508 = vpow.pop %v1507
        %v1509 = vmul.f32 %v1503, 1.442695
        %v1510 = vpow.pop %v1509
        %v1511 = vmul.f32 %v1504, 1.442695
        %v1512 = vpow.pop %v1511
        %v1513 = vsel %vm1304, %v1506, 0.0
        %1514 = vadd.xlane.f32.xlu0 %v1513
        %v1515 = vpop.xlane.xlu0 %1514
        %v1516 = vsel %vm1304, %v1508, 0.0
        %1517 = vadd.xlane.f32.xlu0 %v1516
        %v1518 = vpop.xlane.xlu0 %1517
        %v1519 = vsel %vm1304, %v1510, 0.0
        %1520 = vadd.xlane.f32.xlu0 %v1519
        %v1521 = vpop.xlane.xlu0 %1520
        %v1522 = vsel %vm1304, %v1512, 0.0
        %1523 = vadd.xlane.f32.xlu0 %v1522
        %v1524 = vpop.xlane.xlu0 %1523
        %v1525 = vrcp.pop %v1515
        %v1526 = vrcp.pop %v1518
        %v1527 = vrcp.pop %v1521
        %v1528 = vrcp.pop %v1524
        %v1529 = vmul.f32 %v1506, %v1525
        %v1530 = vmul.f32 %v1508, %v1526
        %v1531 = vmul.f32 %v1510, %v1527
        %v1532 = vmul.f32 %v1512, %v1528
        %v1533 = vpack.c.bf16 %v1529, %v1529
        %v1534 = vpack.c.bf16 %v1530, %v1530
        %v1535 = vpack.c.bf16 %v1531, %v1531
        %v1536 = vpack.c.bf16 %v1532, %v1532
        %v1538 = vsel %vm1304, %v1533, 0
        %vm1540 = vcmask 1043456
        %v1542 = vsel %vm1540, %v1294, 0
        %1544 = vmatprep.subr.bf16.mxu0 0
        %1545 = vmatpush1.bf16.msra.mxu0 0
        %1546 = vmatprep.subr.bf16.mxu0 0
        %1547 = vmatpush1.bf16.msra.mxu0 0
        %1548 = vmatprep.subr.bf16.mxu0 0
        %1549 = vmatpush1.bf16.msra.mxu0 0
        %1550 = vmatprep.subr.bf16.mxu0 0
        %1551 = vmatpush1.bf16.msra.mxu0 0
        %1552 = vmatprep.subr.bf16.mxu0 0
        %1553 = vmatpush1.bf16.msra.mxu0 0
        %1554 = vmatprep.subr.bf16.mxu0 0
        %1555 = vmatpush1.bf16.msra.mxu0 0
        %1556 = vmatprep.subr.bf16.mxu0 0
        %1557 = vmatpush1.bf16.msra.mxu0 0
        %1558 = vmatprep.subr.bf16.mxu0 0
        %1559 = vmatpush1.bf16.msra.mxu0 %v1542
        %1560 = vmatprep.subr.bf16.mxu0 0
        %1561 = vmatpush2.bf16.msra.mxu0 0
        %1562 = vmatprep.subr.bf16.mxu0 0
        %1563 = vmatpush2.bf16.msra.mxu0 0
        %1564 = vmatprep.subr.bf16.mxu0 0
        %1565 = vmatpush2.bf16.msra.mxu0 0
        %1566 = vmatprep.subr.bf16.mxu0 0
        %1567 = vmatpush2.bf16.msra.mxu0 0
        %1568 = vmatprep.subr.bf16.mxu0 0
        %1569 = vmatpush2.bf16.msra.mxu0 0
        %1570 = vmatprep.subr.bf16.mxu0 0
        %1571 = vmatpush2.bf16.msra.mxu0 0
        %1572 = vmatprep.subr.bf16.mxu0 0
        %1573 = vmatpush2.bf16.msra.mxu0 0
        %1574 = vmatprep.subr.bf16.mxu0 0
        %1575 = vmatpush2.bf16.msra.mxu0 0
        %1576 = vmatprep.mubr.bf16.mxu0 0
        %1577 = vmatmul.mubr.bf16.gmra.mxu0 %v1538
        %v1578 = vpop.f32.mrf.mxu0
        %v1579 = vadd.f32 0.0, %v1578
        %v1580 = vpop.f32.mrf.mxu0
        %v1581 = vpop.f32.mrf.mxu0
        %v1582 = vpop.f32.mrf.mxu0
        %1583 = vdwg.mxu0
        %v1585 = vsel %vm1304, %v1534, 0
        %v1588 = vsel %vm1540, %v1295, 0
        %1590 = vmatprep.subr.bf16.mxu0 0
        %1591 = vmatpush1.bf16.msra.mxu0 0
        %1592 = vmatprep.subr.bf16.mxu0 0
        %1593 = vmatpush1.bf16.msra.mxu0 0
        %1594 = vmatprep.subr.bf16.mxu0 0
        %1595 = vmatpush1.bf16.msra.mxu0 0
        %1596 = vmatprep.subr.bf16.mxu0 0
        %1597 = vmatpush1.bf16.msra.mxu0 0
        %1598 = vmatprep.subr.bf16.mxu0 0
        %1599 = vmatpush1.bf16.msra.mxu0 0
        %1600 = vmatprep.subr.bf16.mxu0 0
        %1601 = vmatpush1.bf16.msra.mxu0 0
        %1602 = vmatprep.subr.bf16.mxu0 0
        %1603 = vmatpush1.bf16.msra.mxu0 0
        %1604 = vmatprep.subr.bf16.mxu0 0
        %1605 = vmatpush1.bf16.msra.mxu0 %v1588
        %1606 = vmatprep.subr.bf16.mxu0 0
        %1607 = vmatpush2.bf16.msra.mxu0 0
        %1608 = vmatprep.subr.bf16.mxu0 0
        %1609 = vmatpush2.bf16.msra.mxu0 0
        %1610 = vmatprep.subr.bf16.mxu0 0
        %1611 = vmatpush2.bf16.msra.mxu0 0
        %1612 = vmatprep.subr.bf16.mxu0 0
        %1613 = vmatpush2.bf16.msra.mxu0 0
        %1614 = vmatprep.subr.bf16.mxu0 0
        %1615 = vmatpush2.bf16.msra.mxu0 0
        %1616 = vmatprep.subr.bf16.mxu0 0
        %1617 = vmatpush2.bf16.msra.mxu0 0
        %1618 = vmatprep.subr.bf16.mxu0 0
        %1619 = vmatpush2.bf16.msra.mxu0 0
        %1620 = vmatprep.subr.bf16.mxu0 0
        %1621 = vmatpush2.bf16.msra.mxu0 0
        %1622 = vmatprep.mubr.bf16.mxu0 0
        %1623 = vmatmul.mubr.bf16.gmra.mxu0 %v1585
        %v1624 = vpop.f32.mrf.mxu0
        %v1625 = vadd.f32 0.0, %v1624
        %v1626 = vpop.f32.mrf.mxu0
        %v1627 = vpop.f32.mrf.mxu0
        %v1628 = vpop.f32.mrf.mxu0
        %1629 = vdwg.mxu0
        %v1631 = vsel %vm1304, %v1535, 0
        %v1634 = vsel %vm1540, %v1296, 0
        %1636 = vmatprep.subr.bf16.mxu0 0
        %1637 = vmatpush1.bf16.msra.mxu0 0
        %1638 = vmatprep.subr.bf16.mxu0 0
        %1639 = vmatpush1.bf16.msra.mxu0 0
        %1640 = vmatprep.subr.bf16.mxu0 0
        %1641 = vmatpush1.bf16.msra.mxu0 0
        %1642 = vmatprep.subr.bf16.mxu0 0
        %1643 = vmatpush1.bf16.msra.mxu0 0
        %1644 = vmatprep.subr.bf16.mxu0 0
        %1645 = vmatpush1.bf16.msra.mxu0 0
        %1646 = vmatprep.subr.bf16.mxu0 0
        %1647 = vmatpush1.bf16.msra.mxu0 0
        %1648 = vmatprep.subr.bf16.mxu0 0
        %1649 = vmatpush1.bf16.msra.mxu0 0
        %1650 = vmatprep.subr.bf16.mxu0 0
        %1651 = vmatpush1.bf16.msra.mxu0 %v1634
        %1652 = vmatprep.subr.bf16.mxu0 0
        %1653 = vmatpush2.bf16.msra.mxu0 0
        %1654 = vmatprep.subr.bf16.mxu0 0
        %1655 = vmatpush2.bf16.msra.mxu0 0
        %1656 = vmatprep.subr.bf16.mxu0 0
        %1657 = vmatpush2.bf16.msra.mxu0 0
        %1658 = vmatprep.subr.bf16.mxu0 0
        %1659 = vmatpush2.bf16.msra.mxu0 0
        %1660 = vmatprep.subr.bf16.mxu0 0
        %1661 = vmatpush2.bf16.msra.mxu0 0
        %1662 = vmatprep.subr.bf16.mxu0 0
        %1663 = vmatpush2.bf16.msra.mxu0 0
        %1664 = vmatprep.subr.bf16.mxu0 0
        %1665 = vmatpush2.bf16.msra.mxu0 0
        %1666 = vmatprep.subr.bf16.mxu0 0
        %1667 = vmatpush2.bf16.msra.mxu0 0
        %1668 = vmatprep.mubr.bf16.mxu0 0
        %1669 = vmatmul.mubr.bf16.gmra.mxu0 %v1631
        %v1670 = vpop.f32.mrf.mxu0
        %v1671 = vadd.f32 0.0, %v1670
        %v1672 = vpop.f32.mrf.mxu0
        %v1673 = vpop.f32.mrf.mxu0
        %v1674 = vpop.f32.mrf.mxu0
        %1675 = vdwg.mxu0
        %v1677 = vsel %vm1304, %v1536, 0
        %v1680 = vsel %vm1540, %v1297, 0
        %1682 = vmatprep.subr.bf16.mxu0 0
        %1683 = vmatpush1.bf16.msra.mxu0 0
        %1684 = vmatprep.subr.bf16.mxu0 0
        %1685 = vmatpush1.bf16.msra.mxu0 0
        %1686 = vmatprep.subr.bf16.mxu0 0
        %1687 = vmatpush1.bf16.msra.mxu0 0
        %1688 = vmatprep.subr.bf16.mxu0 0
        %1689 = vmatpush1.bf16.msra.mxu0 0
        %1690 = vmatprep.subr.bf16.mxu0 0
        %1691 = vmatpush1.bf16.msra.mxu0 0
        %1692 = vmatprep.subr.bf16.mxu0 0
        %1693 = vmatpush1.bf16.msra.mxu0 0
        %1694 = vmatprep.subr.bf16.mxu0 0
        %1695 = vmatpush1.bf16.msra.mxu0 0
        %1696 = vmatprep.subr.bf16.mxu0 0
        %1697 = vmatpush1.bf16.msra.mxu0 %v1680
        %1698 = vmatprep.subr.bf16.mxu0 0
        %1699 = vmatpush2.bf16.msra.mxu0 0
        %1700 = vmatprep.subr.bf16.mxu0 0
        %1701 = vmatpush2.bf16.msra.mxu0 0
        %1702 = vmatprep.subr.bf16.mxu0 0
        %1703 = vmatpush2.bf16.msra.mxu0 0
        %1704 = vmatprep.subr.bf16.mxu0 0
        %1705 = vmatpush2.bf16.msra.mxu0 0
        %1706 = vmatprep.subr.bf16.mxu0 0
        %1707 = vmatpush2.bf16.msra.mxu0 0
        %1708 = vmatprep.subr.bf16.mxu0 0
        %1709 = vmatpush2.bf16.msra.mxu0 0
        %1710 = vmatprep.subr.bf16.mxu0 0
        %1711 = vmatpush2.bf16.msra.mxu0 0
        %1712 = vmatprep.subr.bf16.mxu0 0
        %1713 = vmatpush2.bf16.msra.mxu0 0
        %1714 = vmatprep.mubr.bf16.mxu0 0
        %1715 = vmatmul.mubr.bf16.gmra.mxu0 %v1677
        %v1716 = vpop.f32.mrf.mxu0
        %v1717 = vadd.f32 0.0, %v1716
        %v1718 = vpop.f32.mrf.mxu0
        %v1719 = vpop.f32.mrf.mxu0
        %v1720 = vpop.f32.mrf.mxu0
        %1721 = vdwg.mxu0
        %v1722 = vpack.c.bf16 %v1579, %v1579
        %v1723 = vpack.c.bf16 %v1625, %v1625
        %v1724 = vpack.c.bf16 %v1671, %v1671
        %v1725 = vpack.c.bf16 %v1717, %v1717
        %v1726 = vld [vmem:[%s703] sm:$0xf]
        %v1727 = vld [vmem:[%s703 + $0x4] sm:$0xf]
        %v1728 = vld [vmem:[%s703 + $0x8] sm:$0xf]
        %v1729 = vld [vmem:[%s703 + $0xc] sm:$0xf]
        %v1731 = vsel %vm1304, %v1722, 0
        %v1734 = vsel %vm1540, %v1726, 0
        %1736 = vmatprep.subr.bf16.mxu0 0
        %1737 = vmatpush1.bf16.msra.mxu0 0
        %1738 = vmatprep.subr.bf16.mxu0 0
        %1739 = vmatpush1.bf16.msra.mxu0 0
        %1740 = vmatprep.subr.bf16.mxu0 0
        %1741 = vmatpush1.bf16.msra.mxu0 0
        %1742 = vmatprep.subr.bf16.mxu0 0
        %1743 = vmatpush1.bf16.msra.mxu0 0
        %1744 = vmatprep.subr.bf16.mxu0 0
        %1745 = vmatpush1.bf16.msra.mxu0 0
        %1746 = vmatprep.subr.bf16.mxu0 0
        %1747 = vmatpush1.bf16.msra.mxu0 0
        %1748 = vmatprep.subr.bf16.mxu0 0
        %1749 = vmatpush1.bf16.msra.mxu0 0
        %1750 = vmatprep.subr.bf16.mxu0 0
        %1751 = vmatpush1.bf16.msra.mxu0 %v1734
        %1752 = vmatprep.subr.bf16.mxu0 0
        %1753 = vmatpush2.bf16.msra.mxu0 0
        %1754 = vmatprep.subr.bf16.mxu0 0
        %1755 = vmatpush2.bf16.msra.mxu0 0
        %1756 = vmatprep.subr.bf16.mxu0 0
        %1757 = vmatpush2.bf16.msra.mxu0 0
        %1758 = vmatprep.subr.bf16.mxu0 0
        %1759 = vmatpush2.bf16.msra.mxu0 0
        %1760 = vmatprep.subr.bf16.mxu0 0
        %1761 = vmatpush2.bf16.msra.mxu0 0
        %1762 = vmatprep.subr.bf16.mxu0 0
        %1763 = vmatpush2.bf16.msra.mxu0 0
        %1764 = vmatprep.subr.bf16.mxu0 0
        %1765 = vmatpush2.bf16.msra.mxu0 0
        %1766 = vmatprep.subr.bf16.mxu0 0
        %1767 = vmatpush2.bf16.msra.mxu0 0
        %1768 = vmatprep.mubr.bf16.mxu0 0
        %1769 = vmatmul.mubr.bf16.gmra.mxu0 %v1731
        %v1770 = vpop.f32.mrf.mxu0
        %v1771 = vadd.f32 0.0, %v1770
        %v1772 = vpop.f32.mrf.mxu0
        %v1773 = vpop.f32.mrf.mxu0
        %v1774 = vpop.f32.mrf.mxu0
        %1775 = vdwg.mxu0
        %v1777 = vsel %vm1304, %v1723, 0
        %v1780 = vsel %vm1540, %v1727, 0
        %1782 = vmatprep.subr.bf16.mxu0 0
        %1783 = vmatpush1.bf16.msra.mxu0 0
        %1784 = vmatprep.subr.bf16.mxu0 0
        %1785 = vmatpush1.bf16.msra.mxu0 0
        %1786 = vmatprep.subr.bf16.mxu0 0
        %1787 = vmatpush1.bf16.msra.mxu0 0
        %1788 = vmatprep.subr.bf16.mxu0 0
        %1789 = vmatpush1.bf16.msra.mxu0 0
        %1790 = vmatprep.subr.bf16.mxu0 0
        %1791 = vmatpush1.bf16.msra.mxu0 0
        %1792 = vmatprep.subr.bf16.mxu0 0
        %1793 = vmatpush1.bf16.msra.mxu0 0
        %1794 = vmatprep.subr.bf16.mxu0 0
        %1795 = vmatpush1.bf16.msra.mxu0 0
        %1796 = vmatprep.subr.bf16.mxu0 0
        %1797 = vmatpush1.bf16.msra.mxu0 %v1780
        %1798 = vmatprep.subr.bf16.mxu0 0
        %1799 = vmatpush2.bf16.msra.mxu0 0
        %1800 = vmatprep.subr.bf16.mxu0 0
        %1801 = vmatpush2.bf16.msra.mxu0 0
        %1802 = vmatprep.subr.bf16.mxu0 0
        %1803 = vmatpush2.bf16.msra.mxu0 0
        %1804 = vmatprep.subr.bf16.mxu0 0
        %1805 = vmatpush2.bf16.msra.mxu0 0
        %1806 = vmatprep.subr.bf16.mxu0 0
        %1807 = vmatpush2.bf16.msra.mxu0 0
        %1808 = vmatprep.subr.bf16.mxu0 0
        %1809 = vmatpush2.bf16.msra.mxu0 0
        %1810 = vmatprep.subr.bf16.mxu0 0
        %1811 = vmatpush2.bf16.msra.mxu0 0
        %1812 = vmatprep.subr.bf16.mxu0 0
        %1813 = vmatpush2.bf16.msra.mxu0 0
        %1814 = vmatprep.mubr.bf16.mxu0 0
        %1815 = vmatmul.mubr.bf16.gmra.mxu0 %v1777
        %v1816 = vpop.f32.mrf.mxu0
        %v1817 = vadd.f32 0.0, %v1816
        %v1818 = vpop.f32.mrf.mxu0
        %v1819 = vpop.f32.mrf.mxu0
        %v1820 = vpop.f32.mrf.mxu0
        %1821 = vdwg.mxu0
        %v1823 = vsel %vm1304, %v1724, 0
        %v1826 = vsel %vm1540, %v1728, 0
        %1828 = vmatprep.subr.bf16.mxu0 0
        %1829 = vmatpush1.bf16.msra.mxu0 0
        %1830 = vmatprep.subr.bf16.mxu0 0
        %1831 = vmatpush1.bf16.msra.mxu0 0
        %1832 = vmatprep.subr.bf16.mxu0 0
        %1833 = vmatpush1.bf16.msra.mxu0 0
        %1834 = vmatprep.subr.bf16.mxu0 0
        %1835 = vmatpush1.bf16.msra.mxu0 0
        %1836 = vmatprep.subr.bf16.mxu0 0
        %1837 = vmatpush1.bf16.msra.mxu0 0
        %1838 = vmatprep.subr.bf16.mxu0 0
        %1839 = vmatpush1.bf16.msra.mxu0 0
        %1840 = vmatprep.subr.bf16.mxu0 0
        %1841 = vmatpush1.bf16.msra.mxu0 0
        %1842 = vmatprep.subr.bf16.mxu0 0
        %1843 = vmatpush1.bf16.msra.mxu0 %v1826
        %1844 = vmatprep.subr.bf16.mxu0 0
        %1845 = vmatpush2.bf16.msra.mxu0 0
        %1846 = vmatprep.subr.bf16.mxu0 0
        %1847 = vmatpush2.bf16.msra.mxu0 0
        %1848 = vmatprep.subr.bf16.mxu0 0
        %1849 = vmatpush2.bf16.msra.mxu0 0
        %1850 = vmatprep.subr.bf16.mxu0 0
        %1851 = vmatpush2.bf16.msra.mxu0 0
        %1852 = vmatprep.subr.bf16.mxu0 0
        %1853 = vmatpush2.bf16.msra.mxu0 0
        %1854 = vmatprep.subr.bf16.mxu0 0
        %1855 = vmatpush2.bf16.msra.mxu0 0
        %1856 = vmatprep.subr.bf16.mxu0 0
        %1857 = vmatpush2.bf16.msra.mxu0 0
        %1858 = vmatprep.subr.bf16.mxu0 0
        %1859 = vmatpush2.bf16.msra.mxu0 0
        %1860 = vmatprep.mubr.bf16.mxu0 0
        %1861 = vmatmul.mubr.bf16.gmra.mxu0 %v1823
        %v1862 = vpop.f32.mrf.mxu0
        %v1863 = vadd.f32 0.0, %v1862
        %v1864 = vpop.f32.mrf.mxu0
        %v1865 = vpop.f32.mrf.mxu0
        %v1866 = vpop.f32.mrf.mxu0
        %1867 = vdwg.mxu0
        %v1869 = vsel %vm1304, %v1725, 0
        %v1872 = vsel %vm1540, %v1729, 0
        %1874 = vmatprep.subr.bf16.mxu0 0
        %1875 = vmatpush1.bf16.msra.mxu0 0
        %1876 = vmatprep.subr.bf16.mxu0 0
        %1877 = vmatpush1.bf16.msra.mxu0 0
        %1878 = vmatprep.subr.bf16.mxu0 0
        %1879 = vmatpush1.bf16.msra.mxu0 0
        %1880 = vmatprep.subr.bf16.mxu0 0
        %1881 = vmatpush1.bf16.msra.mxu0 0
        %1882 = vmatprep.subr.bf16.mxu0 0
        %1883 = vmatpush1.bf16.msra.mxu0 0
        %1884 = vmatprep.subr.bf16.mxu0 0
        %1885 = vmatpush1.bf16.msra.mxu0 0
        %1886 = vmatprep.subr.bf16.mxu0 0
        %1887 = vmatpush1.bf16.msra.mxu0 0
        %1888 = vmatprep.subr.bf16.mxu0 0
        %1889 = vmatpush1.bf16.msra.mxu0 %v1872
        %1890 = vmatprep.subr.bf16.mxu0 0
        %1891 = vmatpush2.bf16.msra.mxu0 0
        %1892 = vmatprep.subr.bf16.mxu0 0
        %1893 = vmatpush2.bf16.msra.mxu0 0
        %1894 = vmatprep.subr.bf16.mxu0 0
        %1895 = vmatpush2.bf16.msra.mxu0 0
        %1896 = vmatprep.subr.bf16.mxu0 0
        %1897 = vmatpush2.bf16.msra.mxu0 0
        %1898 = vmatprep.subr.bf16.mxu0 0
        %1899 = vmatpush2.bf16.msra.mxu0 0
        %1900 = vmatprep.subr.bf16.mxu0 0
        %1901 = vmatpush2.bf16.msra.mxu0 0
        %1902 = vmatprep.subr.bf16.mxu0 0
        %1903 = vmatpush2.bf16.msra.mxu0 0
        %1904 = vmatprep.subr.bf16.mxu0 0
        %1905 = vmatpush2.bf16.msra.mxu0 0
        %1906 = vmatprep.mubr.bf16.mxu0 0
        %1907 = vmatmul.mubr.bf16.gmra.mxu0 %v1869
        %v1908 = vpop.f32.mrf.mxu0
        %v1909 = vadd.f32 0.0, %v1908
        %v1910 = vpop.f32.mrf.mxu0
        %v1911 = vpop.f32.mrf.mxu0
        %v1912 = vpop.f32.mrf.mxu0
        %1913 = vdwg.mxu0
        %v1914 = vsel %vm800, %v1771, 0.0
        %v1915 = vsel %vm800, %v1817, 0.0
        %v1916 = vadd.f32 %v1914, %v1915
        %v1917 = vsel %vm800, %v1863, 0.0
        %v1918 = vadd.f32 %v1916, %v1917
        %v1919 = vsel %vm800, %v1909, 0.0
        %v1920 = vadd.f32 %v1918, %v1919
        %v1921 = vld [vmem:[%s706] sm:$0x1]
        %v1923 = vlaneseq
        %v1924 = vshrl.u32 %v1923, 7
        %v1925 = vsub.s32 0, %v1924
        %v1926 = vrot.slane %v1921, %v1925
        %v1928 = vadd.f32 %v1920, %v1926
        %v1929 = vadd.f32 %v1928, %v774
        %v1930 = vld [vmem:[%s709] sm:$0x1]
        %v1931 = vld [vmem:[%s712] sm:$0x1]
        %v1932 = vsel %vm800, %v1929, 0.0
        %1933 = vadd.xlane.f32.xlu0 %v1932
        %v1934 = vpop.xlane.xlu0 %1933
        %v1935 = vrcp.pop 32.0
        %v1936 = vmul.f32 %v1934, %v1935
        %v1937 = vsub.f32 %v1929, %v1936
        %v1938 = vmul.f32 %v1937, %v1937
        %v1939 = vsel %vm800, %v1938, 0.0
        %1940 = vadd.xlane.f32.xlu0 %v1939
        %v1941 = vpop.xlane.xlu0 %1940
        %v1942 = vmul.f32 %v1941, %v1935
        %v1943 = vadd.f32 %v1942, 1e-12
        %v1944 = vrsqrt.pop %v1943
        %v1945 = vmul.f32 %v1937, %v1944
        %v1947 = vlaneseq
        %v1948 = vshrl.u32 %v1947, 7
        %v1949 = vsub.s32 0, %v1948
        %v1950 = vrot.slane %v1930, %v1949
        %v1952 = vmul.f32 %v1945, %v1950
        %v1954 = vlaneseq
        %v1955 = vshrl.u32 %v1954, 7
        %v1956 = vsub.s32 0, %v1955
        %v1957 = vrot.slane %v1931, %v1956
        %v1959 = vadd.f32 %v1952, %v1957
        %v1960 = vld [vmem:[%s717] sm:$0xf]
        %v1961 = vld [vmem:[%s717 + $0x4] sm:$0xf]
        %v1962 = vld [vmem:[%s717 + $0x8] sm:$0xf]
        %v1963 = vld [vmem:[%s717 + $0xc] sm:$0xf]
        %v1964 = vpack.c.bf16 %v1959, %v1959
        %v1965 = vld [vmem:[%s720] sm:$0x1]
        %v1967 = vlaneseq
        %v1968 = vshrl.u32 %v1967, 7
        %v1969 = vsub.s32 0, %v1968
        %v1970 = vrot.slane %v1965, %v1969
        %v1976 = vunpack.c.l.b16 %v1960
        %v1977 = vunpack.c.l.b16 %v1961
        %v1978 = vunpack.c.l.b16 %v1962
        %v1979 = vunpack.c.l.b16 %v1963
        %v1980 = vpack.c.b16 %v1977, %v1976
        %v1981 = vpack.c.b16 %v1979, %v1978
        %v1985 = vsel %vm800, %v1964, 0
        %1987 = vmatprep.subr.bf16.mxu0 0
        %1988 = vmatpush1.bf16.msra.mxu0 0
        %1989 = vmatprep.subr.bf16.mxu0 0
        %1990 = vmatpush1.bf16.msra.mxu0 0
        %1991 = vmatprep.subr.bf16.mxu0 0
        %1992 = vmatpush1.bf16.msra.mxu0 0
        %1993 = vmatprep.subr.bf16.mxu0 0
        %1994 = vmatpush1.bf16.msra.mxu0 0
        %1995 = vmatprep.subr.bf16.mxu0 0
        %1996 = vmatpush1.bf16.msra.mxu0 0
        %1997 = vmatprep.subr.bf16.mxu0 0
        %1998 = vmatpush1.bf16.msra.mxu0 0
        %1999 = vmatprep.subr.bf16.mxu0 0
        %2000 = vmatpush1.bf16.msra.mxu0 %v1981
        %2001 = vmatprep.subr.bf16.mxu0 0
        %2002 = vmatpush1.bf16.msra.mxu0 %v1980
        %2003 = vmatprep.subr.bf16.mxu0 0
        %2004 = vmatpush2.bf16.msra.mxu0 0
        %2005 = vmatprep.subr.bf16.mxu0 0
        %2006 = vmatpush2.bf16.msra.mxu0 0
        %2007 = vmatprep.subr.bf16.mxu0 0
        %2008 = vmatpush2.bf16.msra.mxu0 0
        %2009 = vmatprep.subr.bf16.mxu0 0
        %2010 = vmatpush2.bf16.msra.mxu0 0
        %2011 = vmatprep.subr.bf16.mxu0 0
        %2012 = vmatpush2.bf16.msra.mxu0 0
        %2013 = vmatprep.subr.bf16.mxu0 0
        %2014 = vmatpush2.bf16.msra.mxu0 0
        %2015 = vmatprep.subr.bf16.mxu0 0
        %2016 = vmatpush2.bf16.msra.mxu0 0
        %2017 = vmatprep.subr.bf16.mxu0 0
        %2018 = vmatpush2.bf16.msra.mxu0 0
        %2019 = vmatprep.mubr.bf16.mxu0 0
        %2020 = vmatmul.mubr.bf16.gmra.mxu0 %v1985
        %v2021 = vpop.f32.mrf.mxu0
        %v2022 = vadd.f32 %v1970, %v2021
        %v2023 = vpop.f32.mrf.mxu0
        %v2024 = vpop.f32.mrf.mxu0
        %v2025 = vpop.f32.mrf.mxu0
        %2026 = vdwg.mxu0
        %v2027 = vmul.f32 %v2022, %v2022
        %v2028 = vmul.f32 %v2022, %v2027
        %v2029 = vmul.f32 %v2028, 0.044715
        %v2030 = vadd.f32 %v2022, %v2029
        %v2031 = vmul.f32 %v2030, 0.7978846
        %v2032 = vtanh.pop %v2031
        %v2033 = vadd.f32 %v2032, 1.0
        %v2034 = vmul.f32 %v2033, 0.5
        %v2035 = vmul.f32 %v2022, %v2034
        %v2036 = vld [vmem:[%s725] sm:$0xf]
        %v2037 = vld [vmem:[%s725 + $0x4] sm:$0xf]
        %v2038 = vld [vmem:[%s725 + $0x8] sm:$0xf]
        %v2039 = vld [vmem:[%s725 + $0xc] sm:$0xf]
        %v2040 = vld [vmem:[%s725 + $0x10] sm:$0xf]
        %v2041 = vld [vmem:[%s725 + $0x14] sm:$0xf]
        %v2042 = vld [vmem:[%s725 + $0x18] sm:$0xf]
        %v2043 = vld [vmem:[%s725 + $0x1c] sm:$0xf]
        %v2044 = vpack.c.bf16 %v2035, %v2035
        %v2045 = vld [vmem:[%s728] sm:$0x1]
        %v2047 = vlaneseq
        %v2048 = vshrl.u32 %v2047, 7
        %v2049 = vsub.s32 0, %v2048
        %v2050 = vrot.slane %v2045, %v2049
        %v2060 = vunpack.c.l.b16 %v2036
        %v2061 = vunpack.c.l.b16 %v2037
        %v2062 = vunpack.c.l.b16 %v2038
        %v2063 = vunpack.c.l.b16 %v2039
        %v2064 = vunpack.c.l.b16 %v2040
        %v2065 = vunpack.c.l.b16 %v2041
        %v2066 = vunpack.c.l.b16 %v2042
        %v2067 = vunpack.c.l.b16 %v2043
        %v2068 = vpack.c.b16 %v2061, %v2060
        %v2069 = vpack.c.b16 %v2063, %v2062
        %v2070 = vpack.c.b16 %v2065, %v2064
        %v2071 = vpack.c.b16 %v2067, %v2066
        %vm2076 = vcmask 523264
        %v2078 = vsel %vm2076, %v2044, 0
        %2080 = vmatprep.subr.bf16.mxu0 0
        %2081 = vmatpush1.bf16.msra.mxu0 0
        %2082 = vmatprep.subr.bf16.mxu0 0
        %2083 = vmatpush1.bf16.msra.mxu0 0
        %2084 = vmatprep.subr.bf16.mxu0 0
        %2085 = vmatpush1.bf16.msra.mxu0 0
        %2086 = vmatprep.subr.bf16.mxu0 0
        %2087 = vmatpush1.bf16.msra.mxu0 0
        %2088 = vmatprep.subr.bf16.mxu0 0
        %2089 = vmatpush1.bf16.msra.mxu0 %v2071
        %2090 = vmatprep.subr.bf16.mxu0 0
        %2091 = vmatpush1.bf16.msra.mxu0 %v2070
        %2092 = vmatprep.subr.bf16.mxu0 0
        %2093 = vmatpush1.bf16.msra.mxu0 %v2069
        %2094 = vmatprep.subr.bf16.mxu0 0
        %2095 = vmatpush1.bf16.msra.mxu0 %v2068
        %2096 = vmatprep.subr.bf16.mxu0 0
        %2097 = vmatpush2.bf16.msra.mxu0 0
        %2098 = vmatprep.subr.bf16.mxu0 0
        %2099 = vmatpush2.bf16.msra.mxu0 0
        %2100 = vmatprep.subr.bf16.mxu0 0
        %2101 = vmatpush2.bf16.msra.mxu0 0
        %2102 = vmatprep.subr.bf16.mxu0 0
        %2103 = vmatpush2.bf16.msra.mxu0 0
        %2104 = vmatprep.subr.bf16.mxu0 0
        %2105 = vmatpush2.bf16.msra.mxu0 0
        %2106 = vmatprep.subr.bf16.mxu0 0
        %2107 = vmatpush2.bf16.msra.mxu0 0
        %2108 = vmatprep.subr.bf16.mxu0 0
        %2109 = vmatpush2.bf16.msra.mxu0 0
        %2110 = vmatprep.subr.bf16.mxu0 0
        %2111 = vmatpush2.bf16.msra.mxu0 0
        %2112 = vmatprep.mubr.bf16.mxu0 0
        %2113 = vmatmul.mubr.bf16.gmra.mxu0 %v2078
        %v2114 = vpop.f32.mrf.mxu0
        %v2115 = vadd.f32 %v2050, %v2114
        %v2116 = vpop.f32.mrf.mxu0
        %v2117 = vpop.f32.mrf.mxu0
        %v2118 = vpop.f32.mrf.mxu0
        %2119 = vdwg.mxu0
        %v2120 = vadd.f32 %v2115, %v1959
        %v2121 = vld [vmem:[%s731] sm:$0x1]
        %v2122 = vld [vmem:[%s734] sm:$0x1]
        %v2123 = vsel %vm800, %v2120, 0.0
        %2124 = vadd.xlane.f32.xlu0 %v2123
        %v2125 = vpop.xlane.xlu0 %2124
        %v2126 = vmul.f32 %v2125, %v1935
        %v2127 = vsub.f32 %v2120, %v2126
        %v2128 = vmul.f32 %v2127, %v2127
        %v2129 = vsel %vm800, %v2128, 0.0
        %2130 = vadd.xlane.f32.xlu0 %v2129
        %v2131 = vpop.xlane.xlu0 %2130
        %v2132 = vmul.f32 %v2131, %v1935
        %v2133 = vadd.f32 %v2132, 1e-12
        %v2134 = vrsqrt.pop %v2133
        %v2135 = vmul.f32 %v2127, %v2134
        %v2137 = vlaneseq
        %v2138 = vshrl.u32 %v2137, 7
        %v2139 = vsub.s32 0, %v2138
        %v2140 = vrot.slane %v2121, %v2139
        %v2142 = vmul.f32 %v2135, %v2140
        %v2144 = vlaneseq
        %v2145 = vshrl.u32 %v2144, 7
        %v2146 = vsub.s32 0, %v2145
        %v2147 = vrot.slane %v2122, %v2146
        %v2149 = vadd.f32 %v2142, %v2147
        %2150 = vst.msk [vmem:[#allocation2] sm:$0xff] %vm800, %v2149
        %p2151 = scmp.eq.s32.totalorder %s35, 1
        // Predicated region
        $region89: #{bert_embed.1} parent=83 // pred_check
          %p2152 = pneg %p2151
        $region90: #{bert_embed.1} parent=83 // pred_check_branch
          %2154 = sbr.rel (%p2152) target = $region92
        $region91: #{bert_embed.1} parent=83 // pred_region
          %v2155 = vpack.c.bf16 %v2149, %v2149
          %vm2156 = vcmask 257024
          %2157 = vst.msk [vmem:[%s683] sm:$0xf] %vm2156, %v2155
        $region92: #{bert_embed.1} parent=83 // pred_fallthru
          _
        %s2158 = sand.u32 %s456, 1
        %s2159 = scalar_lea.sflag [#allocation4], %s2158
        %s2160 = sand.u32 %s456, 1
        %s2161 = smul.addr %s2160, 4
        %s2162 = scalar_lea.vmem [#allocation3], %s2161
        // Predicated region
        $region93: #{bert_embed.1} parent=83 // pred_check
          %p2163 = pneg %p466
        $region94: #{bert_embed.1} parent=83 // pred_check_branch
          %2165 = sbr.rel (%p2163) target = $region96
        $region95: #{bert_embed.1} parent=83 // pred_region
          %s2167 = ssub.s32 64, 64
          %2168 = vsyncadd %s2159, %s2167
          %s2169 = smul.addr %s34, 64
          %s2170 = scalar_lea.hbm %s16, %s2169
          %s2172 = sshll.u32 %s2162, 4
          %s2173 = int_to_ptr.vmem [resolvable:$true] %s2172
          %2175 = dma.vmem_to_hbm [thread:$0]  %s2173, 64, %s2170, %s2159
        $region96: #{bert_embed.1} parent=83 // pred_fallthru
          _
      $region84: #{bert_embed.1} parent=5 // pred_fallthru
        _
      %p2176 = scmp.le.s32.totalorder 2, %s25
      // Predicated region
      $region97: #{bert_embed.1} parent=5 // pred_check
        %p2177 = pneg %p2176
      $region98: #{bert_embed.1} parent=5 // pred_check_branch
        %2179 = sbr.rel (%p2177) target = $region100
      $region99: #{bert_embed.1} parent=5 // pred_region
        %s2180 = ssub.s32 %s25, 2
        // Predicated region
        $region101: #{bert_embed.1} parent=99 // pred_check
          %p2181 = pneg %p472
        $region102: #{bert_embed.1} parent=99 // pred_check_branch
          %2183 = sbr.rel (%p2181) target = $region104
        $region103: #{bert_embed.1} parent=99 // pred_region
          %s2184 = sand.u32 %s457, 1
          %s2185 = scalar_lea.sflag [#allocation4], %s2184
          %s2186 = sand.u32 %s457, 1
          %s2187 = smul.addr %s2186, 4
          %s2188 = scalar_lea.vmem [#allocation3], %s2187
          %2189 = dma.done %s2185, 64
        $region104: #{bert_embed.1} parent=99 // pred_fallthru
          _
      $region100: #{bert_embed.1} parent=5 // pred_fallthru
        _
    $region6: #{bert_embed.1} parent=1 // loop_footer
      %s29 = sadd.s32 1, %s25
    $region7: #{bert_embed.1} parent=1 // loop_footer_branch
      %24 = sbr.rel target = $region3
    $region8: #{bert_embed.1} parent=1 // loop_exit
      _
    %2190 = vsyncpa [#allocation4], 1
    %s2191 = scalar_lea.sflag [#allocation4], 1
    %2192 = vsyncpa %s2191, 1

</llo_original>
